<compile_context>
chip_gen: v5e
topology: v5e:2x2
jax: 0.10.0
libtpu: 0.0.40
codegen_flags: <defaults>
</compile_context>

<pallas_src>
import jax
import jax.numpy as jnp
from jax.experimental import pallas as pl
from jax.experimental.pallas import tpu as pltpu


def mul_conv1x1_kernel(w_ref, s_ref, x_ref, o_ref):
    # w_ref: (Cout, Cin)  s_ref: (1, Cin)  x_ref: (Cin, HW)  o_ref: (Cout, HW)
    # Fold the SE per-channel scale into the weight (scales 38K w-elements instead of
    # 376K x-elements).  Multiply in f32 (v5e VPU has no bf16), then cast both MXU
    # operands to bf16 so the matmul is a single MXU pass; accumulate in f32.
    w_scaled = (w_ref[...] * s_ref[...]).astype(jnp.bfloat16)
    x_bf16 = x_ref[...].astype(jnp.bfloat16)
    o_ref[...] = jnp.dot(
        w_scaled, x_bf16, preferred_element_type=jnp.float32
    ).astype(o_ref.dtype)


def mul_conv1x1(x_nchw, scale_nc11, weight_oi11):
    """x_nchw: (1, Cin, H, W); scale_nc11: (1, Cin, 1, 1); weight_oi11: (Cout, Cin, 1, 1)."""
    N, Cin, H, W = x_nchw.shape
    Cout = weight_oi11.shape[0]
    assert N == 1, "kernel written for batch 1 (matches reference module)"
    HW = H * W

    # All three reshapes are metadata-only (no HBM round-trips) for contiguous NCHW, N=1.
    x2 = x_nchw.reshape(Cin, HW)          # (K, HW)
    s2 = scale_nc11.reshape(1, Cin)       # (1, K)
    w2 = weight_oi11.reshape(Cout, Cin)   # (Cout, K)

    itemsize = jnp.dtype(x_nchw.dtype).itemsize
    cost = pl.CostEstimate(
        flops=2 * Cout * Cin * HW,
        transcendentals=0,
        bytes_accessed=int((Cin * HW + Cout * Cin + Cin + Cout * HW) * itemsize),
    )

    # Single grid step: no Cout split (avoids sequential-step overhead on v5e/v6e and
    # x-stream duplication on a v7x 2-TC split).  Every BlockSpec covers the full array,
    # so the (8,128) divisibility rule does not apply and the output stays lane-dense
    # (last dim = HW = 784) instead of Cout=80 masked stores.
    out2 = pl.pallas_call(
        mul_conv1x1_kernel,
        out_shape=jax.ShapeDtypeStruct((Cout, HW), x_nchw.dtype),
        grid=(1,),
        in_specs=[
            pl.BlockSpec((Cout, Cin), lambda i: (0, 0)),  # weight
            pl.BlockSpec((1, Cin), lambda i: (0, 0)),     # SE scale
            pl.BlockSpec((Cin, HW), lambda i: (0, 0)),    # activations
        ],
        out_specs=pl.BlockSpec((Cout, HW), lambda i: (0, 0)),
        compiler_params=pltpu.CompilerParams(
            dimension_semantics=("arbitrary",),
        ),
        cost_estimate=cost,
    )(w2, s2, x2)

    # Back to NCHW — again a metadata reshape, no transpose.
    return out2.reshape(N, Cout, H, W)


if __name__ == "__main__":
    key = jax.random.PRNGKey(0)
    k1, k2, k3 = jax.random.split(key, 3)

    # Shapes implied by the module: Conv2d(480, 80, 1x1), input (1, 480, 28, 28).
    N, Cin, Cout, H, W = 1, 480, 80, 28, 28
    x223 = jax.random.normal(k1, (N, Cin, H, W), dtype=jnp.float32)
    x228 = jax.random.normal(k2, (N, Cin, 1, 1), dtype=jnp.float32)
    # deterministic Conv2d(480, 80, 1x1, bias=False) weight
    weight = jax.random.normal(k3, (Cout, Cin, 1, 1), dtype=jnp.float32) * 0.02

    out = mul_conv1x1(x223, x228, weight)
    jax.block_until_ready(out)

    # Reference in plain JAX f32 (einsum over channels).  Tolerance widened to match
    # bf16 MXU inputs (f32 accumulation): observed max abs error ~5e-3 at these scales.
    ref = jnp.einsum("nchw,oc->nohw", x223 * x228, weight.reshape(Cout, Cin))
    assert out.shape == (N, Cout, H, W)
    assert jnp.allclose(out, ref, atol=2e-2, rtol=2e-2)

    print("KERNEL_OK")
</pallas_src>

<mosaic_0001>
module attributes {stable_mosaic.version = 11 : i64} {
  func.func @mul_conv1x1_kernel(%arg0: i32, %arg1: memref<80x480xf32, #tpu.memory_space<vmem>>, %arg2: memref<1x480xf32, #tpu.memory_space<vmem>>, %arg3: memref<480x784xf32, #tpu.memory_space<vmem>>, %arg4: memref<80x784xf32, #tpu.memory_space<vmem>>) attributes {dimension_semantics = [#tpu.dimension_semantics<arbitrary>], iteration_bounds = array<i64: 1>, scalar_prefetch = 0 : i64, scratch_operands = 0 : i64, tpu.core_type = #tpu.core_type<tc>, window_params = [{pipeline_mode = #tpu.pipeline_mode<synchronous>, transform_indices = @transform_0, window_bounds = array<i64: 80, 480>}, {pipeline_mode = #tpu.pipeline_mode<synchronous>, transform_indices = @transform_1, window_bounds = array<i64: 1, 480>}, {pipeline_mode = #tpu.pipeline_mode<synchronous>, transform_indices = @transform_2, window_bounds = array<i64: 480, 784>}, {pipeline_mode = #tpu.pipeline_mode<synchronous>, transform_indices = @transform_3, window_bounds = array<i64: 80, 784>}]} {
    %c0 = arith.constant 0 : index
    %c0_0 = arith.constant 0 : index
    %0 = vector.load %arg1[%c0, %c0_0] : memref<80x480xf32, #tpu.memory_space<vmem>>, vector<80x480xf32>
    %c0_1 = arith.constant 0 : index
    %c0_2 = arith.constant 0 : index
    %1 = vector.load %arg2[%c0_1, %c0_2] : memref<1x480xf32, #tpu.memory_space<vmem>>, vector<1x480xf32>
    %2 = vector.broadcast %1 : vector<1x480xf32> to vector<80x480xf32>
    %3 = arith.mulf %0, %2 : vector<80x480xf32>
    %4 = arith.truncf %3 : vector<80x480xf32> to vector<80x480xbf16>
    %c0_3 = arith.constant 0 : index
    %c0_4 = arith.constant 0 : index
    %5 = vector.load %arg3[%c0_3, %c0_4] : memref<480x784xf32, #tpu.memory_space<vmem>>, vector<480x784xf32>
    %6 = arith.truncf %5 : vector<480x784xf32> to vector<480x784xbf16>
    %cst = arith.constant dense<0.000000e+00> : vector<80x784xf32>
    %7 = tpu.matmul %4, %6, %cst {dimension_numbers = #tpu.dot_dimension_numbers<[1], [0], [0], [1], [0, 0, 1, 1], [], []>} : vector<80x480xbf16>, vector<480x784xbf16>, vector<80x784xf32> -> vector<80x784xf32>
    %c0_5 = arith.constant 0 : index
    %c0_6 = arith.constant 0 : index
    %8 = vector.load %arg4[%c0_5, %c0_6] : memref<80x784xf32, #tpu.memory_space<vmem>>, vector<80x784xf32>
    tpu.vector_store %arg4[%c0_5, %c0_6], %7 {strides = array<i32>} : memref<80x784xf32, #tpu.memory_space<vmem>>, vector<80x784xf32>,
    return
  }
  func.func @transform_0(%arg0: i32) -> (i32, i32) {
    %c0_i32 = arith.constant 0 : i32
    %c0_i32_0 = arith.constant 0 : i32
    %c0_i32_1 = arith.constant 0 : i32
    return %c0_i32, %c0_i32_0 : i32, i32
  }
  func.func @transform_1(%arg0: i32) -> (i32, i32) {
    %c0_i32 = arith.constant 0 : i32
    %c0_i32_0 = arith.constant 0 : i32
    %c0_i32_1 = arith.constant 0 : i32
    return %c0_i32, %c0_i32_0 : i32, i32
  }
  func.func @transform_2(%arg0: i32) -> (i32, i32) {
    %c0_i32 = arith.constant 0 : i32
    %c0_i32_0 = arith.constant 0 : i32
    %c0_i32_1 = arith.constant 0 : i32
    return %c0_i32, %c0_i32_0 : i32, i32
  }
  func.func @transform_3(%arg0: i32) -> (i32, i32) {
    %c0_i32 = arith.constant 0 : i32
    %c0_i32_0 = arith.constant 0 : i32
    %c0_i32_1 = arith.constant 0 : i32
    return %c0_i32, %c0_i32_0 : i32, i32
  }
}

</mosaic_0001>

<llo_original>
// kernel: tpu_custom_call.1
$region0: #{tpu_custom_call.1}
  #allocation0 [shape = 'u32[]', space=smem, size = 0x4, offset = 0x4, fixed_abs, tag = 'smem constant byte address 0x4 - core index']
  #allocation1 [shape = 'u32[72,128]{1,0:T(1,128)}', space=vmem, size = 0x9000, scoped, tag = 'internal scratch']
  %s0 = inlined_call_operand.vmem [shape: f32[80,480], index: 0, kind: input, shape index: {}]
  %s1 = inlined_call_operand.vmem [shape: f32[1,480], index: 1, kind: input, shape index: {}]
  %s2 = inlined_call_operand.vmem [shape: f32[480,784], index: 2, kind: input, shape index: {}]
  %s3 = inlined_call_operand.hbm [shape: f32[80,784], index: 3, kind: output, shape index: {}]
  %s4 = sld [smem:[#allocation0]]
  $region22: #{tpu_custom_call.1} parent=0
    _
  %s6 = ssub.s32 1, %s4
  %s7 = scalar_select 0, %s6, %s4
  $region1: #{tpu_custom_call.1} parent=0
    #allocation2 [shape = 'u8[286720]{0}', space=vmem, size = 0x46000, scoped, tag = 'output window, operand 0, single buffered']
    #allocation3 [shape = 's32[1]{0}', space=sflag, size = 0x4, scoped, tag = 'scoped memory for tpu_custom_call.1']
    %8 = vsyncpa [#allocation3], 0
    // Predicated region
    $region2: #{tpu_custom_call.1} parent=1 // pred_check
      _
    $region3: #{tpu_custom_call.1} parent=1 // pred_check_branch
      %10 = sbr.rel (0) target = $region5
    $region4: #{tpu_custom_call.1} parent=1 // pred_region
      _
    $region5: #{tpu_custom_call.1} parent=1 // pred_fallthru
      _
    // Predicated region
    $region6: #{tpu_custom_call.1} parent=1 // pred_check
      _
    $region7: #{tpu_custom_call.1} parent=1 // pred_check_branch
      %12 = sbr.rel (0) target = $region9
    $region8: #{tpu_custom_call.1} parent=1 // pred_region
      _
    $region9: #{tpu_custom_call.1} parent=1 // pred_fallthru
      _
    // Predicated region
    $region10: #{tpu_custom_call.1} parent=1 // pred_check
      _
    $region11: #{tpu_custom_call.1} parent=1 // pred_check_branch
      %14 = sbr.rel (0) target = $region13
    $region12: #{tpu_custom_call.1} parent=1 // pred_region
      _
    $region13: #{tpu_custom_call.1} parent=1 // pred_fallthru
      _
    %v16 = vld [vmem:[%s0] sm:$0xff]
    %v17 = vld [vmem:[%s0 + $0x8] sm:$0xff]
    %v18 = vld [vmem:[%s0 + $0x10] sm:$0xff]
    %v19 = vld [vmem:[%s0 + $0x18] sm:$0xff]
    %v20 = vld [vmem:[%s0 + $0x20] sm:$0xff]
    %v21 = vld [vmem:[%s0 + $0x28] sm:$0xff]
    %v22 = vld [vmem:[%s0 + $0x30] sm:$0xff]
    %v23 = vld [vmem:[%s0 + $0x38] sm:$0xff]
    %v24 = vld [vmem:[%s0 + $0x40] sm:$0xff]
    %v25 = vld [vmem:[%s0 + $0x48] sm:$0xff]
    %v26 = vld [vmem:[%s0 + $0x50] sm:$0xff]
    %v27 = vld [vmem:[%s0 + $0x58] sm:$0xff]
    %v28 = vld [vmem:[%s0 + $0x60] sm:$0xff]
    %v29 = vld [vmem:[%s0 + $0x68] sm:$0xff]
    %v30 = vld [vmem:[%s0 + $0x70] sm:$0xff]
    %v31 = vld [vmem:[%s0 + $0x78] sm:$0xff]
    %v32 = vld [vmem:[%s0 + $0x80] sm:$0xff]
    %v33 = vld [vmem:[%s0 + $0x88] sm:$0xff]
    %v34 = vld [vmem:[%s0 + $0x90] sm:$0xff]
    %v35 = vld [vmem:[%s0 + $0x98] sm:$0xff]
    %v36 = vld [vmem:[%s0 + $0xa0] sm:$0xff]
    %v37 = vld [vmem:[%s0 + $0xa8] sm:$0xff]
    %v38 = vld [vmem:[%s0 + $0xb0] sm:$0xff]
    %v39 = vld [vmem:[%s0 + $0xb8] sm:$0xff]
    %v40 = vld [vmem:[%s0 + $0xc0] sm:$0xff]
    %v41 = vld [vmem:[%s0 + $0xc8] sm:$0xff]
    %v42 = vld [vmem:[%s0 + $0xd0] sm:$0xff]
    %v43 = vld [vmem:[%s0 + $0xd8] sm:$0xff]
    %v44 = vld [vmem:[%s0 + $0xe0] sm:$0xff]
    %v45 = vld [vmem:[%s0 + $0xe8] sm:$0xff]
    %v46 = vld [vmem:[%s0 + $0xf0] sm:$0xff]
    %v47 = vld [vmem:[%s0 + $0xf8] sm:$0xff]
    %v48 = vld [vmem:[%s0 + $0x100] sm:$0xff]
    %v49 = vld [vmem:[%s0 + $0x108] sm:$0xff]
    %v50 = vld [vmem:[%s0 + $0x110] sm:$0xff]
    %v51 = vld [vmem:[%s0 + $0x118] sm:$0xff]
    %v52 = vld [vmem:[%s0 + $0x120] sm:$0xff]
    %v53 = vld [vmem:[%s0 + $0x128] sm:$0xff]
    %v54 = vld [vmem:[%s0 + $0x130] sm:$0xff]
    %v55 = vld [vmem:[%s0 + $0x138] sm:$0xff]
    %v56 = vld [vmem:[%s1] sm:$0xf]
    %v58 = vperm.slane %v56, 0
    %v59 = vperm.slane %v56, 1
    %v60 = vperm.slane %v56, 2
    %v61 = vperm.slane %v56, 3
    %v66 = vmul.f32 %v16, %v58
    %v67 = vmul.f32 %v17, %v59
    %v68 = vmul.f32 %v18, %v60
    %v69 = vmul.f32 %v19, %v61
    %v70 = vmul.f32 %v20, %v58
    %v71 = vmul.f32 %v21, %v59
    %v72 = vmul.f32 %v22, %v60
    %v73 = vmul.f32 %v23, %v61
    %v74 = vmul.f32 %v24, %v58
    %v75 = vmul.f32 %v25, %v59
    %v76 = vmul.f32 %v26, %v60
    %v77 = vmul.f32 %v27, %v61
    %v78 = vmul.f32 %v28, %v58
    %v79 = vmul.f32 %v29, %v59
    %v80 = vmul.f32 %v30, %v60
    %v81 = vmul.f32 %v31, %v61
    %v82 = vmul.f32 %v32, %v58
    %v83 = vmul.f32 %v33, %v59
    %v84 = vmul.f32 %v34, %v60
    %v85 = vmul.f32 %v35, %v61
    %v86 = vmul.f32 %v36, %v58
    %v87 = vmul.f32 %v37, %v59
    %v88 = vmul.f32 %v38, %v60
    %v89 = vmul.f32 %v39, %v61
    %v90 = vmul.f32 %v40, %v58
    %v91 = vmul.f32 %v41, %v59
    %v92 = vmul.f32 %v42, %v60
    %v93 = vmul.f32 %v43, %v61
    %v94 = vmul.f32 %v44, %v58
    %v95 = vmul.f32 %v45, %v59
    %v96 = vmul.f32 %v46, %v60
    %v97 = vmul.f32 %v47, %v61
    %v98 = vmul.f32 %v48, %v58
    %v99 = vmul.f32 %v49, %v59
    %v100 = vmul.f32 %v50, %v60
    %v101 = vmul.f32 %v51, %v61
    %v102 = vmul.f32 %v52, %v58
    %v103 = vmul.f32 %v53, %v59
    %v104 = vmul.f32 %v54, %v60
    %v105 = vmul.f32 %v55, %v61
    %v106 = vpack.c.bf16 %v70, %v66
    %v107 = vpack.c.bf16 %v71, %v67
    %v108 = vpack.c.bf16 %v72, %v68
    %v109 = vpack.c.bf16 %v73, %v69
    %v110 = vpack.c.bf16 %v78, %v74
    %v111 = vpack.c.bf16 %v79, %v75
    %v112 = vpack.c.bf16 %v80, %v76
    %v113 = vpack.c.bf16 %v81, %v77
    %v114 = vpack.c.bf16 %v86, %v82
    %v115 = vpack.c.bf16 %v87, %v83
    %v116 = vpack.c.bf16 %v88, %v84
    %v117 = vpack.c.bf16 %v89, %v85
    %v118 = vpack.c.bf16 %v94, %v90
    %v119 = vpack.c.bf16 %v95, %v91
    %v120 = vpack.c.bf16 %v96, %v92
    %v121 = vpack.c.bf16 %v97, %v93
    %v122 = vpack.c.bf16 %v102, %v98
    %v123 = vpack.c.bf16 %v103, %v99
    %v124 = vpack.c.bf16 %v104, %v100
    %v125 = vpack.c.bf16 %v105, %v101
    %v126 = vld [vmem:[%s2] sm:$0xff]
    %v127 = vld [vmem:[%s2 + $0x8] sm:$0xff]
    %v128 = vld [vmem:[%s2 + $0x10] sm:$0xff]
    %v129 = vld [vmem:[%s2 + $0x18] sm:$0xff]
    %v130 = vld [vmem:[%s2 + $0x20] sm:$0xff]
    %v131 = vld [vmem:[%s2 + $0x28] sm:$0xff]
    %v132 = vld [vmem:[%s2 + $0x30] sm:$0xff]
    %v133 = vld [vmem:[%s2 + $0x38] sm:$0xff]
    %v134 = vld [vmem:[%s2 + $0x40] sm:$0xff]
    %v135 = vld [vmem:[%s2 + $0x48] sm:$0xff]
    %v136 = vld [vmem:[%s2 + $0x50] sm:$0xff]
    %v137 = vld [vmem:[%s2 + $0x58] sm:$0xff]
    %v138 = vld [vmem:[%s2 + $0x60] sm:$0xff]
    %v139 = vld [vmem:[%s2 + $0x68] sm:$0xff]
    %v140 = vld [vmem:[%s2 + $0x70] sm:$0xff]
    %v141 = vld [vmem:[%s2 + $0x78] sm:$0xff]
    %v142 = vld [vmem:[%s2 + $0x80] sm:$0xff]
    %v143 = vld [vmem:[%s2 + $0x88] sm:$0xff]
    %v144 = vld [vmem:[%s2 + $0x90] sm:$0xff]
    %v145 = vld [vmem:[%s2 + $0x98] sm:$0xff]
    %v146 = vld [vmem:[%s2 + $0xa0] sm:$0xff]
    %v147 = vld [vmem:[%s2 + $0xa8] sm:$0xff]
    %v148 = vld [vmem:[%s2 + $0xb0] sm:$0xff]
    %v149 = vld [vmem:[%s2 + $0xb8] sm:$0xff]
    %v150 = vld [vmem:[%s2 + $0xc0] sm:$0xff]
    %v151 = vld [vmem:[%s2 + $0xc8] sm:$0xff]
    %v152 = vld [vmem:[%s2 + $0xd0] sm:$0xff]
    %v153 = vld [vmem:[%s2 + $0xd8] sm:$0xff]
    %v154 = vld [vmem:[%s2 + $0xe0] sm:$0xff]
    %v155 = vld [vmem:[%s2 + $0xe8] sm:$0xff]
    %v156 = vld [vmem:[%s2 + $0xf0] sm:$0xff]
    %v157 = vld [vmem:[%s2 + $0xf8] sm:$0xff]
    %v158 = vld [vmem:[%s2 + $0x100] sm:$0xff]
    %v159 = vld [vmem:[%s2 + $0x108] sm:$0xff]
    %v160 = vld [vmem:[%s2 + $0x110] sm:$0xff]
    %v161 = vld [vmem:[%s2 + $0x118] sm:$0xff]
    %v162 = vld [vmem:[%s2 + $0x120] sm:$0xff]
    %v163 = vld [vmem:[%s2 + $0x128] sm:$0xff]
    %v164 = vld [vmem:[%s2 + $0x130] sm:$0xff]
    %v165 = vld [vmem:[%s2 + $0x138] sm:$0xff]
    %v166 = vld [vmem:[%s2 + $0x140] sm:$0xff]
    %v167 = vld [vmem:[%s2 + $0x148] sm:$0xff]
    %v168 = vld [vmem:[%s2 + $0x150] sm:$0xff]
    %v169 = vld [vmem:[%s2 + $0x158] sm:$0xff]
    %v170 = vld [vmem:[%s2 + $0x160] sm:$0xff]
    %v171 = vld [vmem:[%s2 + $0x168] sm:$0xff]
    %v172 = vld [vmem:[%s2 + $0x170] sm:$0xff]
    %v173 = vld [vmem:[%s2 + $0x178] sm:$0xff]
    %v174 = vld [vmem:[%s2 + $0x180] sm:$0xff]
    %v175 = vld [vmem:[%s2 + $0x188] sm:$0xff]
    %v176 = vld [vmem:[%s2 + $0x190] sm:$0xff]
    %v177 = vld [vmem:[%s2 + $0x198] sm:$0xff]
    %v178 = vld [vmem:[%s2 + $0x1a0] sm:$0xff]
    %v179 = vld [vmem:[%s2 + $0x1a8] sm:$0xff]
    %v180 = vld [vmem:[%s2 + $0x1b0] sm:$0xff]
    %v181 = vld [vmem:[%s2 + $0x1b8] sm:$0xff]
    %v182 = vld [vmem:[%s2 + $0x1c0] sm:$0xff]
    %v183 = vld [vmem:[%s2 + $0x1c8] sm:$0xff]
    %v184 = vld [vmem:[%s2 + $0x1d0] sm:$0xff]
    %v185 = vld [vmem:[%s2 + $0x1d8] sm:$0xff]
    %v186 = vld [vmem:[%s2 + $0x1e0] sm:$0xff]
    %v187 = vld [vmem:[%s2 + $0x1e8] sm:$0xff]
    %v188 = vld [vmem:[%s2 + $0x1f0] sm:$0xff]
    %v189 = vld [vmem:[%s2 + $0x1f8] sm:$0xff]
    %v190 = vld [vmem:[%s2 + $0x200] sm:$0xff]
    %v191 = vld [vmem:[%s2 + $0x208] sm:$0xff]
    %v192 = vld [vmem:[%s2 + $0x210] sm:$0xff]
    %v193 = vld [vmem:[%s2 + $0x218] sm:$0xff]
    %v194 = vld [vmem:[%s2 + $0x220] sm:$0xff]
    %v195 = vld [vmem:[%s2 + $0x228] sm:$0xff]
    %v196 = vld [vmem:[%s2 + $0x230] sm:$0xff]
    %v197 = vld [vmem:[%s2 + $0x238] sm:$0xff]
    %v198 = vld [vmem:[%s2 + $0x240] sm:$0xff]
    %v199 = vld [vmem:[%s2 + $0x248] sm:$0xff]
    %v200 = vld [vmem:[%s2 + $0x250] sm:$0xff]
    %v201 = vld [vmem:[%s2 + $0x258] sm:$0xff]
    %v202 = vld [vmem:[%s2 + $0x260] sm:$0xff]
    %v203 = vld [vmem:[%s2 + $0x268] sm:$0xff]
    %v204 = vld [vmem:[%s2 + $0x270] sm:$0xff]
    %v205 = vld [vmem:[%s2 + $0x278] sm:$0xff]
    %v206 = vld [vmem:[%s2 + $0x280] sm:$0xff]
    %v207 = vld [vmem:[%s2 + $0x288] sm:$0xff]
    %v208 = vld [vmem:[%s2 + $0x290] sm:$0xff]
    %v209 = vld [vmem:[%s2 + $0x298] sm:$0xff]
    %v210 = vld [vmem:[%s2 + $0x2a0] sm:$0xff]
    %v211 = vld [vmem:[%s2 + $0x2a8] sm:$0xff]
    %v212 = vld [vmem:[%s2 + $0x2b0] sm:$0xff]
    %v213 = vld [vmem:[%s2 + $0x2b8] sm:$0xff]
    %v214 = vld [vmem:[%s2 + $0x2c0] sm:$0xff]
    %v215 = vld [vmem:[%s2 + $0x2c8] sm:$0xff]
    %v216 = vld [vmem:[%s2 + $0x2d0] sm:$0xff]
    %v217 = vld [vmem:[%s2 + $0x2d8] sm:$0xff]
    %v218 = vld [vmem:[%s2 + $0x2e0] sm:$0xff]
    %v219 = vld [vmem:[%s2 + $0x2e8] sm:$0xff]
    %v220 = vld [vmem:[%s2 + $0x2f0] sm:$0xff]
    %v221 = vld [vmem:[%s2 + $0x2f8] sm:$0xff]
    %v222 = vld [vmem:[%s2 + $0x300] sm:$0xff]
    %v223 = vld [vmem:[%s2 + $0x308] sm:$0xff]
    %v224 = vld [vmem:[%s2 + $0x310] sm:$0xff]
    %v225 = vld [vmem:[%s2 + $0x318] sm:$0xff]
    %v226 = vld [vmem:[%s2 + $0x320] sm:$0xff]
    %v227 = vld [vmem:[%s2 + $0x328] sm:$0xff]
    %v228 = vld [vmem:[%s2 + $0x330] sm:$0xff]
    %v229 = vld [vmem:[%s2 + $0x338] sm:$0xff]
    %v230 = vld [vmem:[%s2 + $0x340] sm:$0xff]
    %v231 = vld [vmem:[%s2 + $0x348] sm:$0xff]
    %v232 = vld [vmem:[%s2 + $0x350] sm:$0xff]
    %v233 = vld [vmem:[%s2 + $0x358] sm:$0xff]
    %v234 = vld [vmem:[%s2 + $0x360] sm:$0xff]
    %v235 = vld [vmem:[%s2 + $0x368] sm:$0xff]
    %v236 = vld [vmem:[%s2 + $0x370] sm:$0xff]
    %v237 = vld [vmem:[%s2 + $0x378] sm:$0xff]
    %v238 = vld [vmem:[%s2 + $0x380] sm:$0xff]
    %v239 = vld [vmem:[%s2 + $0x388] sm:$0xff]
    %v240 = vld [vmem:[%s2 + $0x390] sm:$0xff]
    %v241 = vld [vmem:[%s2 + $0x398] sm:$0xff]
    %v242 = vld [vmem:[%s2 + $0x3a0] sm:$0xff]
    %v243 = vld [vmem:[%s2 + $0x3a8] sm:$0xff]
    %v244 = vld [vmem:[%s2 + $0x3b0] sm:$0xff]
    %v245 = vld [vmem:[%s2 + $0x3b8] sm:$0xff]
    %v246 = vld [vmem:[%s2 + $0x3c0] sm:$0xff]
    %v247 = vld [vmem:[%s2 + $0x3c8] sm:$0xff]
    %v248 = vld [vmem:[%s2 + $0x3d0] sm:$0xff]
    %v249 = vld [vmem:[%s2 + $0x3d8] sm:$0xff]
    %v250 = vld [vmem:[%s2 + $0x3e0] sm:$0xff]
    %v251 = vld [vmem:[%s2 + $0x3e8] sm:$0xff]
    %v252 = vld [vmem:[%s2 + $0x3f0] sm:$0xff]
    %v253 = vld [vmem:[%s2 + $0x3f8] sm:$0xff]
    %v254 = vld [vmem:[%s2 + $0x400] sm:$0xff]
    %v255 = vld [vmem:[%s2 + $0x408] sm:$0xff]
    %v256 = vld [vmem:[%s2 + $0x410] sm:$0xff]
    %v257 = vld [vmem:[%s2 + $0x418] sm:$0xff]
    %v258 = vld [vmem:[%s2 + $0x420] sm:$0xff]
    %v259 = vld [vmem:[%s2 + $0x428] sm:$0xff]
    %v260 = vld [vmem:[%s2 + $0x430] sm:$0xff]
    %v261 = vld [vmem:[%s2 + $0x438] sm:$0xff]
    %v262 = vld [vmem:[%s2 + $0x440] sm:$0xff]
    %v263 = vld [vmem:[%s2 + $0x448] sm:$0xff]
    %v264 = vld [vmem:[%s2 + $0x450] sm:$0xff]
    %v265 = vld [vmem:[%s2 + $0x458] sm:$0xff]
    %v266 = vld [vmem:[%s2 + $0x460] sm:$0xff]
    %v267 = vld [vmem:[%s2 + $0x468] sm:$0xff]
    %v268 = vld [vmem:[%s2 + $0x470] sm:$0xff]
    %v269 = vld [vmem:[%s2 + $0x478] sm:$0xff]
    %v270 = vld [vmem:[%s2 + $0x480] sm:$0xff]
    %v271 = vld [vmem:[%s2 + $0x488] sm:$0xff]
    %v272 = vld [vmem:[%s2 + $0x490] sm:$0xff]
    %v273 = vld [vmem:[%s2 + $0x498] sm:$0xff]
    %v274 = vld [vmem:[%s2 + $0x4a0] sm:$0xff]
    %v275 = vld [vmem:[%s2 + $0x4a8] sm:$0xff]
    %v276 = vld [vmem:[%s2 + $0x4b0] sm:$0xff]
    %v277 = vld [vmem:[%s2 + $0x4b8] sm:$0xff]
    %v278 = vld [vmem:[%s2 + $0x4c0] sm:$0xff]
    %v279 = vld [vmem:[%s2 + $0x4c8] sm:$0xff]
    %v280 = vld [vmem:[%s2 + $0x4d0] sm:$0xff]
    %v281 = vld [vmem:[%s2 + $0x4d8] sm:$0xff]
    %v282 = vld [vmem:[%s2 + $0x4e0] sm:$0xff]
    %v283 = vld [vmem:[%s2 + $0x4e8] sm:$0xff]
    %v284 = vld [vmem:[%s2 + $0x4f0] sm:$0xff]
    %v285 = vld [vmem:[%s2 + $0x4f8] sm:$0xff]
    %v286 = vld [vmem:[%s2 + $0x500] sm:$0xff]
    %v287 = vld [vmem:[%s2 + $0x508] sm:$0xff]
    %v288 = vld [vmem:[%s2 + $0x510] sm:$0xff]
    %v289 = vld [vmem:[%s2 + $0x518] sm:$0xff]
    %v290 = vld [vmem:[%s2 + $0x520] sm:$0xff]
    %v291 = vld [vmem:[%s2 + $0x528] sm:$0xff]
    %v292 = vld [vmem:[%s2 + $0x530] sm:$0xff]
    %v293 = vld [vmem:[%s2 + $0x538] sm:$0xff]
    %v294 = vld [vmem:[%s2 + $0x540] sm:$0xff]
    %v295 = vld [vmem:[%s2 + $0x548] sm:$0xff]
    %v296 = vld [vmem:[%s2 + $0x550] sm:$0xff]
    %v297 = vld [vmem:[%s2 + $0x558] sm:$0xff]
    %v298 = vld [vmem:[%s2 + $0x560] sm:$0xff]
    %v299 = vld [vmem:[%s2 + $0x568] sm:$0xff]
    %v300 = vld [vmem:[%s2 + $0x570] sm:$0xff]
    %v301 = vld [vmem:[%s2 + $0x578] sm:$0xff]
    %v302 = vld [vmem:[%s2 + $0x580] sm:$0xff]
    %v303 = vld [vmem:[%s2 + $0x588] sm:$0xff]
    %v304 = vld [vmem:[%s2 + $0x590] sm:$0xff]
    %v305 = vld [vmem:[%s2 + $0x598] sm:$0xff]
    %v306 = vld [vmem:[%s2 + $0x5a0] sm:$0xff]
    %v307 = vld [vmem:[%s2 + $0x5a8] sm:$0xff]
    %v308 = vld [vmem:[%s2 + $0x5b0] sm:$0xff]
    %v309 = vld [vmem:[%s2 + $0x5b8] sm:$0xff]
    %v310 = vld [vmem:[%s2 + $0x5c0] sm:$0xff]
    %v311 = vld [vmem:[%s2 + $0x5c8] sm:$0xff]
    %v312 = vld [vmem:[%s2 + $0x5d0] sm:$0xff]
    %v313 = vld [vmem:[%s2 + $0x5d8] sm:$0xff]
    %v314 = vld [vmem:[%s2 + $0x5e0] sm:$0xff]
    %v315 = vld [vmem:[%s2 + $0x5e8] sm:$0xff]
    %v316 = vld [vmem:[%s2 + $0x5f0] sm:$0xff]
    %v317 = vld [vmem:[%s2 + $0x5f8] sm:$0xff]
    %v318 = vld [vmem:[%s2 + $0x600] sm:$0xff]
    %v319 = vld [vmem:[%s2 + $0x608] sm:$0xff]
    %v320 = vld [vmem:[%s2 + $0x610] sm:$0xff]
    %v321 = vld [vmem:[%s2 + $0x618] sm:$0xff]
    %v322 = vld [vmem:[%s2 + $0x620] sm:$0xff]
    %v323 = vld [vmem:[%s2 + $0x628] sm:$0xff]
    %v324 = vld [vmem:[%s2 + $0x630] sm:$0xff]
    %v325 = vld [vmem:[%s2 + $0x638] sm:$0xff]
    %v326 = vld [vmem:[%s2 + $0x640] sm:$0xff]
    %v327 = vld [vmem:[%s2 + $0x648] sm:$0xff]
    %v328 = vld [vmem:[%s2 + $0x650] sm:$0xff]
    %v329 = vld [vmem:[%s2 + $0x658] sm:$0xff]
    %v330 = vld [vmem:[%s2 + $0x660] sm:$0xff]
    %v331 = vld [vmem:[%s2 + $0x668] sm:$0xff]
    %v332 = vld [vmem:[%s2 + $0x670] sm:$0xff]
    %v333 = vld [vmem:[%s2 + $0x678] sm:$0xff]
    %v334 = vld [vmem:[%s2 + $0x680] sm:$0xff]
    %v335 = vld [vmem:[%s2 + $0x688] sm:$0xff]
    %v336 = vld [vmem:[%s2 + $0x690] sm:$0xff]
    %v337 = vld [vmem:[%s2 + $0x698] sm:$0xff]
    %v338 = vld [vmem:[%s2 + $0x6a0] sm:$0xff]
    %v339 = vld [vmem:[%s2 + $0x6a8] sm:$0xff]
    %v340 = vld [vmem:[%s2 + $0x6b0] sm:$0xff]
    %v341 = vld [vmem:[%s2 + $0x6b8] sm:$0xff]
    %v342 = vld [vmem:[%s2 + $0x6c0] sm:$0xff]
    %v343 = vld [vmem:[%s2 + $0x6c8] sm:$0xff]
    %v344 = vld [vmem:[%s2 + $0x6d0] sm:$0xff]
    %v345 = vld [vmem:[%s2 + $0x6d8] sm:$0xff]
    %v346 = vld [vmem:[%s2 + $0x6e0] sm:$0xff]
    %v347 = vld [vmem:[%s2 + $0x6e8] sm:$0xff]
    %v348 = vld [vmem:[%s2 + $0x6f0] sm:$0xff]
    %v349 = vld [vmem:[%s2 + $0x6f8] sm:$0xff]
    %v350 = vld [vmem:[%s2 + $0x700] sm:$0xff]
    %v351 = vld [vmem:[%s2 + $0x708] sm:$0xff]
    %v352 = vld [vmem:[%s2 + $0x710] sm:$0xff]
    %v353 = vld [vmem:[%s2 + $0x718] sm:$0xff]
    %v354 = vld [vmem:[%s2 + $0x720] sm:$0xff]
    %v355 = vld [vmem:[%s2 + $0x728] sm:$0xff]
    %v356 = vld [vmem:[%s2 + $0x730] sm:$0xff]
    %v357 = vld [vmem:[%s2 + $0x738] sm:$0xff]
    %v358 = vld [vmem:[%s2 + $0x740] sm:$0xff]
    %v359 = vld [vmem:[%s2 + $0x748] sm:$0xff]
    %v360 = vld [vmem:[%s2 + $0x750] sm:$0xff]
    %v361 = vld [vmem:[%s2 + $0x758] sm:$0xff]
    %v362 = vld [vmem:[%s2 + $0x760] sm:$0xff]
    %v363 = vld [vmem:[%s2 + $0x768] sm:$0xff]
    %v364 = vld [vmem:[%s2 + $0x770] sm:$0xff]
    %v365 = vld [vmem:[%s2 + $0x778] sm:$0xff]
    %v366 = vld [vmem:[%s2 + $0x780] sm:$0xff]
    %v367 = vld [vmem:[%s2 + $0x788] sm:$0xff]
    %v368 = vld [vmem:[%s2 + $0x790] sm:$0xff]
    %v369 = vld [vmem:[%s2 + $0x798] sm:$0xff]
    %v370 = vld [vmem:[%s2 + $0x7a0] sm:$0xff]
    %v371 = vld [vmem:[%s2 + $0x7a8] sm:$0xff]
    %v372 = vld [vmem:[%s2 + $0x7b0] sm:$0xff]
    %v373 = vld [vmem:[%s2 + $0x7b8] sm:$0xff]
    %v374 = vld [vmem:[%s2 + $0x7c0] sm:$0xff]
    %v375 = vld [vmem:[%s2 + $0x7c8] sm:$0xff]
    %v376 = vld [vmem:[%s2 + $0x7d0] sm:$0xff]
    %v377 = vld [vmem:[%s2 + $0x7d8] sm:$0xff]
    %v378 = vld [vmem:[%s2 + $0x7e0] sm:$0xff]
    %v379 = vld [vmem:[%s2 + $0x7e8] sm:$0xff]
    %v380 = vld [vmem:[%s2 + $0x7f0] sm:$0xff]
    %v381 = vld [vmem:[%s2 + $0x7f8] sm:$0xff]
    %v382 = vld [vmem:[%s2 + $0x800] sm:$0xff]
    %v383 = vld [vmem:[%s2 + $0x808] sm:$0xff]
    %v384 = vld [vmem:[%s2 + $0x810] sm:$0xff]
    %v385 = vld [vmem:[%s2 + $0x818] sm:$0xff]
    %v386 = vld [vmem:[%s2 + $0x820] sm:$0xff]
    %v387 = vld [vmem:[%s2 + $0x828] sm:$0xff]
    %v388 = vld [vmem:[%s2 + $0x830] sm:$0xff]
    %v389 = vld [vmem:[%s2 + $0x838] sm:$0xff]
    %v390 = vld [vmem:[%s2 + $0x840] sm:$0xff]
    %v391 = vld [vmem:[%s2 + $0x848] sm:$0xff]
    %v392 = vld [vmem:[%s2 + $0x850] sm:$0xff]
    %v393 = vld [vmem:[%s2 + $0x858] sm:$0xff]
    %v394 = vld [vmem:[%s2 + $0x860] sm:$0xff]
    %v395 = vld [vmem:[%s2 + $0x868] sm:$0xff]
    %v396 = vld [vmem:[%s2 + $0x870] sm:$0xff]
    %v397 = vld [vmem:[%s2 + $0x878] sm:$0xff]
    %v398 = vld [vmem:[%s2 + $0x880] sm:$0xff]
    %v399 = vld [vmem:[%s2 + $0x888] sm:$0xff]
    %v400 = vld [vmem:[%s2 + $0x890] sm:$0xff]
    %v401 = vld [vmem:[%s2 + $0x898] sm:$0xff]
    %v402 = vld [vmem:[%s2 + $0x8a0] sm:$0xff]
    %v403 = vld [vmem:[%s2 + $0x8a8] sm:$0xff]
    %v404 = vld [vmem:[%s2 + $0x8b0] sm:$0xff]
    %v405 = vld [vmem:[%s2 + $0x8b8] sm:$0xff]
    %v406 = vld [vmem:[%s2 + $0x8c0] sm:$0xff]
    %v407 = vld [vmem:[%s2 + $0x8c8] sm:$0xff]
    %v408 = vld [vmem:[%s2 + $0x8d0] sm:$0xff]
    %v409 = vld [vmem:[%s2 + $0x8d8] sm:$0xff]
    %v410 = vld [vmem:[%s2 + $0x8e0] sm:$0xff]
    %v411 = vld [vmem:[%s2 + $0x8e8] sm:$0xff]
    %v412 = vld [vmem:[%s2 + $0x8f0] sm:$0xff]
    %v413 = vld [vmem:[%s2 + $0x8f8] sm:$0xff]
    %v414 = vld [vmem:[%s2 + $0x900] sm:$0xff]
    %v415 = vld [vmem:[%s2 + $0x908] sm:$0xff]
    %v416 = vld [vmem:[%s2 + $0x910] sm:$0xff]
    %v417 = vld [vmem:[%s2 + $0x918] sm:$0xff]
    %v418 = vld [vmem:[%s2 + $0x920] sm:$0xff]
    %v419 = vld [vmem:[%s2 + $0x928] sm:$0xff]
    %v420 = vld [vmem:[%s2 + $0x930] sm:$0xff]
    %v421 = vld [vmem:[%s2 + $0x938] sm:$0xff]
    %v422 = vld [vmem:[%s2 + $0x940] sm:$0xff]
    %v423 = vld [vmem:[%s2 + $0x948] sm:$0xff]
    %v424 = vld [vmem:[%s2 + $0x950] sm:$0xff]
    %v425 = vld [vmem:[%s2 + $0x958] sm:$0xff]
    %v426 = vld [vmem:[%s2 + $0x960] sm:$0xff]
    %v427 = vld [vmem:[%s2 + $0x968] sm:$0xff]
    %v428 = vld [vmem:[%s2 + $0x970] sm:$0xff]
    %v429 = vld [vmem:[%s2 + $0x978] sm:$0xff]
    %v430 = vld [vmem:[%s2 + $0x980] sm:$0xff]
    %v431 = vld [vmem:[%s2 + $0x988] sm:$0xff]
    %v432 = vld [vmem:[%s2 + $0x990] sm:$0xff]
    %v433 = vld [vmem:[%s2 + $0x998] sm:$0xff]
    %v434 = vld [vmem:[%s2 + $0x9a0] sm:$0xff]
    %v435 = vld [vmem:[%s2 + $0x9a8] sm:$0xff]
    %v436 = vld [vmem:[%s2 + $0x9b0] sm:$0xff]
    %v437 = vld [vmem:[%s2 + $0x9b8] sm:$0xff]
    %v438 = vld [vmem:[%s2 + $0x9c0] sm:$0xff]
    %v439 = vld [vmem:[%s2 + $0x9c8] sm:$0xff]
    %v440 = vld [vmem:[%s2 + $0x9d0] sm:$0xff]
    %v441 = vld [vmem:[%s2 + $0x9d8] sm:$0xff]
    %v442 = vld [vmem:[%s2 + $0x9e0] sm:$0xff]
    %v443 = vld [vmem:[%s2 + $0x9e8] sm:$0xff]
    %v444 = vld [vmem:[%s2 + $0x9f0] sm:$0xff]
    %v445 = vld [vmem:[%s2 + $0x9f8] sm:$0xff]
    %v446 = vld [vmem:[%s2 + $0xa00] sm:$0xff]
    %v447 = vld [vmem:[%s2 + $0xa08] sm:$0xff]
    %v448 = vld [vmem:[%s2 + $0xa10] sm:$0xff]
    %v449 = vld [vmem:[%s2 + $0xa18] sm:$0xff]
    %v450 = vld [vmem:[%s2 + $0xa20] sm:$0xff]
    %v451 = vld [vmem:[%s2 + $0xa28] sm:$0xff]
    %v452 = vld [vmem:[%s2 + $0xa30] sm:$0xff]
    %v453 = vld [vmem:[%s2 + $0xa38] sm:$0xff]
    %v454 = vld [vmem:[%s2 + $0xa40] sm:$0xff]
    %v455 = vld [vmem:[%s2 + $0xa48] sm:$0xff]
    %v456 = vld [vmem:[%s2 + $0xa50] sm:$0xff]
    %v457 = vld [vmem:[%s2 + $0xa58] sm:$0xff]
    %v458 = vld [vmem:[%s2 + $0xa60] sm:$0xff]
    %v459 = vld [vmem:[%s2 + $0xa68] sm:$0xff]
    %v460 = vld [vmem:[%s2 + $0xa70] sm:$0xff]
    %v461 = vld [vmem:[%s2 + $0xa78] sm:$0xff]
    %v462 = vld [vmem:[%s2 + $0xa80] sm:$0xff]
    %v463 = vld [vmem:[%s2 + $0xa88] sm:$0xff]
    %v464 = vld [vmem:[%s2 + $0xa90] sm:$0xff]
    %v465 = vld [vmem:[%s2 + $0xa98] sm:$0xff]
    %v466 = vld [vmem:[%s2 + $0xaa0] sm:$0xff]
    %v467 = vld [vmem:[%s2 + $0xaa8] sm:$0xff]
    %v468 = vld [vmem:[%s2 + $0xab0] sm:$0xff]
    %v469 = vld [vmem:[%s2 + $0xab8] sm:$0xff]
    %v470 = vld [vmem:[%s2 + $0xac0] sm:$0xff]
    %v471 = vld [vmem:[%s2 + $0xac8] sm:$0xff]
    %v472 = vld [vmem:[%s2 + $0xad0] sm:$0xff]
    %v473 = vld [vmem:[%s2 + $0xad8] sm:$0xff]
    %v474 = vld [vmem:[%s2 + $0xae0] sm:$0xff]
    %v475 = vld [vmem:[%s2 + $0xae8] sm:$0xff]
    %v476 = vld [vmem:[%s2 + $0xaf0] sm:$0xff]
    %v477 = vld [vmem:[%s2 + $0xaf8] sm:$0xff]
    %v478 = vld [vmem:[%s2 + $0xb00] sm:$0xff]
    %v479 = vld [vmem:[%s2 + $0xb08] sm:$0xff]
    %v480 = vld [vmem:[%s2 + $0xb10] sm:$0xff]
    %v481 = vld [vmem:[%s2 + $0xb18] sm:$0xff]
    %v482 = vld [vmem:[%s2 + $0xb20] sm:$0xff]
    %v483 = vld [vmem:[%s2 + $0xb28] sm:$0xff]
    %v484 = vld [vmem:[%s2 + $0xb30] sm:$0xff]
    %v485 = vld [vmem:[%s2 + $0xb38] sm:$0xff]
    %v486 = vld [vmem:[%s2 + $0xb40] sm:$0xff]
    %v487 = vld [vmem:[%s2 + $0xb48] sm:$0xff]
    %v488 = vld [vmem:[%s2 + $0xb50] sm:$0xff]
    %v489 = vld [vmem:[%s2 + $0xb58] sm:$0xff]
    %v490 = vld [vmem:[%s2 + $0xb60] sm:$0xff]
    %v491 = vld [vmem:[%s2 + $0xb68] sm:$0xff]
    %v492 = vld [vmem:[%s2 + $0xb70] sm:$0xff]
    %v493 = vld [vmem:[%s2 + $0xb78] sm:$0xff]
    %v494 = vld [vmem:[%s2 + $0xb80] sm:$0xff]
    %v495 = vld [vmem:[%s2 + $0xb88] sm:$0xff]
    %v496 = vld [vmem:[%s2 + $0xb90] sm:$0xff]
    %v497 = vld [vmem:[%s2 + $0xb98] sm:$0xff]
    %v498 = vld [vmem:[%s2 + $0xba0] sm:$0xff]
    %v499 = vld [vmem:[%s2 + $0xba8] sm:$0xff]
    %v500 = vld [vmem:[%s2 + $0xbb0] sm:$0xff]
    %v501 = vld [vmem:[%s2 + $0xbb8] sm:$0xff]
    %v502 = vld [vmem:[%s2 + $0xbc0] sm:$0xff]
    %v503 = vld [vmem:[%s2 + $0xbc8] sm:$0xff]
    %v504 = vld [vmem:[%s2 + $0xbd0] sm:$0xff]
    %v505 = vld [vmem:[%s2 + $0xbd8] sm:$0xff]
    %v506 = vld [vmem:[%s2 + $0xbe0] sm:$0xff]
    %v507 = vld [vmem:[%s2 + $0xbe8] sm:$0xff]
    %v508 = vld [vmem:[%s2 + $0xbf0] sm:$0xff]
    %v509 = vld [vmem:[%s2 + $0xbf8] sm:$0xff]
    %v510 = vld [vmem:[%s2 + $0xc00] sm:$0xff]
    %v511 = vld [vmem:[%s2 + $0xc08] sm:$0xff]
    %v512 = vld [vmem:[%s2 + $0xc10] sm:$0xff]
    %v513 = vld [vmem:[%s2 + $0xc18] sm:$0xff]
    %v514 = vld [vmem:[%s2 + $0xc20] sm:$0xff]
    %v515 = vld [vmem:[%s2 + $0xc28] sm:$0xff]
    %v516 = vld [vmem:[%s2 + $0xc30] sm:$0xff]
    %v517 = vld [vmem:[%s2 + $0xc38] sm:$0xff]
    %v518 = vld [vmem:[%s2 + $0xc40] sm:$0xff]
    %v519 = vld [vmem:[%s2 + $0xc48] sm:$0xff]
    %v520 = vld [vmem:[%s2 + $0xc50] sm:$0xff]
    %v521 = vld [vmem:[%s2 + $0xc58] sm:$0xff]
    %v522 = vld [vmem:[%s2 + $0xc60] sm:$0xff]
    %v523 = vld [vmem:[%s2 + $0xc68] sm:$0xff]
    %v524 = vld [vmem:[%s2 + $0xc70] sm:$0xff]
    %v525 = vld [vmem:[%s2 + $0xc78] sm:$0xff]
    %v526 = vld [vmem:[%s2 + $0xc80] sm:$0xff]
    %v527 = vld [vmem:[%s2 + $0xc88] sm:$0xff]
    %v528 = vld [vmem:[%s2 + $0xc90] sm:$0xff]
    %v529 = vld [vmem:[%s2 + $0xc98] sm:$0xff]
    %v530 = vld [vmem:[%s2 + $0xca0] sm:$0xff]
    %v531 = vld [vmem:[%s2 + $0xca8] sm:$0xff]
    %v532 = vld [vmem:[%s2 + $0xcb0] sm:$0xff]
    %v533 = vld [vmem:[%s2 + $0xcb8] sm:$0xff]
    %v534 = vld [vmem:[%s2 + $0xcc0] sm:$0xff]
    %v535 = vld [vmem:[%s2 + $0xcc8] sm:$0xff]
    %v536 = vld [vmem:[%s2 + $0xcd0] sm:$0xff]
    %v537 = vld [vmem:[%s2 + $0xcd8] sm:$0xff]
    %v538 = vld [vmem:[%s2 + $0xce0] sm:$0xff]
    %v539 = vld [vmem:[%s2 + $0xce8] sm:$0xff]
    %v540 = vld [vmem:[%s2 + $0xcf0] sm:$0xff]
    %v541 = vld [vmem:[%s2 + $0xcf8] sm:$0xff]
    %v542 = vld [vmem:[%s2 + $0xd00] sm:$0xff]
    %v543 = vld [vmem:[%s2 + $0xd08] sm:$0xff]
    %v544 = vld [vmem:[%s2 + $0xd10] sm:$0xff]
    %v545 = vld [vmem:[%s2 + $0xd18] sm:$0xff]
    %v546 = vpack.c.bf16 %v133, %v126
    %v547 = vpack.c.bf16 %v134, %v127
    %v548 = vpack.c.bf16 %v135, %v128
    %v549 = vpack.c.bf16 %v136, %v129
    %v550 = vpack.c.bf16 %v137, %v130
    %v551 = vpack.c.bf16 %v138, %v131
    %v552 = vpack.c.bf16 %v139, %v132
    %v553 = vpack.c.bf16 %v147, %v140
    %v554 = vpack.c.bf16 %v148, %v141
    %v555 = vpack.c.bf16 %v149, %v142
    %v556 = vpack.c.bf16 %v150, %v143
    %v557 = vpack.c.bf16 %v151, %v144
    %v558 = vpack.c.bf16 %v152, %v145
    %v559 = vpack.c.bf16 %v153, %v146
    %v560 = vpack.c.bf16 %v161, %v154
    %v561 = vpack.c.bf16 %v162, %v155
    %v562 = vpack.c.bf16 %v163, %v156
    %v563 = vpack.c.bf16 %v164, %v157
    %v564 = vpack.c.bf16 %v165, %v158
    %v565 = vpack.c.bf16 %v166, %v159
    %v566 = vpack.c.bf16 %v167, %v160
    %v567 = vpack.c.bf16 %v175, %v168
    %v568 = vpack.c.bf16 %v176, %v169
    %v569 = vpack.c.bf16 %v177, %v170
    %v570 = vpack.c.bf16 %v178, %v171
    %v571 = vpack.c.bf16 %v179, %v172
    %v572 = vpack.c.bf16 %v180, %v173
    %v573 = vpack.c.bf16 %v181, %v174
    %v574 = vpack.c.bf16 %v189, %v182
    %v575 = vpack.c.bf16 %v190, %v183
    %v576 = vpack.c.bf16 %v191, %v184
    %v577 = vpack.c.bf16 %v192, %v185
    %v578 = vpack.c.bf16 %v193, %v186
    %v579 = vpack.c.bf16 %v194, %v187
    %v580 = vpack.c.bf16 %v195, %v188
    %v581 = vpack.c.bf16 %v203, %v196
    %v582 = vpack.c.bf16 %v204, %v197
    %v583 = vpack.c.bf16 %v205, %v198
    %v584 = vpack.c.bf16 %v206, %v199
    %v585 = vpack.c.bf16 %v207, %v200
    %v586 = vpack.c.bf16 %v208, %v201
    %v587 = vpack.c.bf16 %v209, %v202
    %v588 = vpack.c.bf16 %v217, %v210
    %v589 = vpack.c.bf16 %v218, %v211
    %v590 = vpack.c.bf16 %v219, %v212
    %v591 = vpack.c.bf16 %v220, %v213
    %v592 = vpack.c.bf16 %v221, %v214
    %v593 = vpack.c.bf16 %v222, %v215
    %v594 = vpack.c.bf16 %v223, %v216
    %v595 = vpack.c.bf16 %v231, %v224
    %v596 = vpack.c.bf16 %v232, %v225
    %v597 = vpack.c.bf16 %v233, %v226
    %v598 = vpack.c.bf16 %v234, %v227
    %v599 = vpack.c.bf16 %v235, %v228
    %v600 = vpack.c.bf16 %v236, %v229
    %v601 = vpack.c.bf16 %v237, %v230
    %v602 = vpack.c.bf16 %v245, %v238
    %v603 = vpack.c.bf16 %v246, %v239
    %v604 = vpack.c.bf16 %v247, %v240
    %v605 = vpack.c.bf16 %v248, %v241
    %v606 = vpack.c.bf16 %v249, %v242
    %v607 = vpack.c.bf16 %v250, %v243
    %v608 = vpack.c.bf16 %v251, %v244
    %v609 = vpack.c.bf16 %v259, %v252
    %v610 = vpack.c.bf16 %v260, %v253
    %v611 = vpack.c.bf16 %v261, %v254
    %v612 = vpack.c.bf16 %v262, %v255
    %v613 = vpack.c.bf16 %v263, %v256
    %v614 = vpack.c.bf16 %v264, %v257
    %v615 = vpack.c.bf16 %v265, %v258
    %v616 = vpack.c.bf16 %v273, %v266
    %v617 = vpack.c.bf16 %v274, %v267
    %v618 = vpack.c.bf16 %v275, %v268
    %v619 = vpack.c.bf16 %v276, %v269
    %v620 = vpack.c.bf16 %v277, %v270
    %v621 = vpack.c.bf16 %v278, %v271
    %v622 = vpack.c.bf16 %v279, %v272
    %v623 = vpack.c.bf16 %v287, %v280
    %v624 = vpack.c.bf16 %v288, %v281
    %v625 = vpack.c.bf16 %v289, %v282
    %v626 = vpack.c.bf16 %v290, %v283
    %v627 = vpack.c.bf16 %v291, %v284
    %v628 = vpack.c.bf16 %v292, %v285
    %v629 = vpack.c.bf16 %v293, %v286
    %v630 = vpack.c.bf16 %v301, %v294
    %v631 = vpack.c.bf16 %v302, %v295
    %v632 = vpack.c.bf16 %v303, %v296
    %v633 = vpack.c.bf16 %v304, %v297
    %v634 = vpack.c.bf16 %v305, %v298
    %v635 = vpack.c.bf16 %v306, %v299
    %v636 = vpack.c.bf16 %v307, %v300
    %v637 = vpack.c.bf16 %v315, %v308
    %v638 = vpack.c.bf16 %v316, %v309
    %v639 = vpack.c.bf16 %v317, %v310
    %v640 = vpack.c.bf16 %v318, %v311
    %v641 = vpack.c.bf16 %v319, %v312
    %v642 = vpack.c.bf16 %v320, %v313
    %v643 = vpack.c.bf16 %v321, %v314
    %v644 = vpack.c.bf16 %v329, %v322
    %v645 = vpack.c.bf16 %v330, %v323
    %v646 = vpack.c.bf16 %v331, %v324
    %v647 = vpack.c.bf16 %v332, %v325
    %v648 = vpack.c.bf16 %v333, %v326
    %v649 = vpack.c.bf16 %v334, %v327
    %v650 = vpack.c.bf16 %v335, %v328
    %v651 = vpack.c.bf16 %v343, %v336
    %v652 = vpack.c.bf16 %v344, %v337
    %v653 = vpack.c.bf16 %v345, %v338
    %v654 = vpack.c.bf16 %v346, %v339
    %v655 = vpack.c.bf16 %v347, %v340
    %v656 = vpack.c.bf16 %v348, %v341
    %v657 = vpack.c.bf16 %v349, %v342
    %v658 = vpack.c.bf16 %v357, %v350
    %v659 = vpack.c.bf16 %v358, %v351
    %v660 = vpack.c.bf16 %v359, %v352
    %v661 = vpack.c.bf16 %v360, %v353
    %v662 = vpack.c.bf16 %v361, %v354
    %v663 = vpack.c.bf16 %v362, %v355
    %v664 = vpack.c.bf16 %v363, %v356
    %v665 = vpack.c.bf16 %v371, %v364
    %v666 = vpack.c.bf16 %v372, %v365
    %v667 = vpack.c.bf16 %v373, %v366
    %v668 = vpack.c.bf16 %v374, %v367
    %v669 = vpack.c.bf16 %v375, %v368
    %v670 = vpack.c.bf16 %v376, %v369
    %v671 = vpack.c.bf16 %v377, %v370
    %v672 = vpack.c.bf16 %v385, %v378
    %v673 = vpack.c.bf16 %v386, %v379
    %v674 = vpack.c.bf16 %v387, %v380
    %v675 = vpack.c.bf16 %v388, %v381
    %v676 = vpack.c.bf16 %v389, %v382
    %v677 = vpack.c.bf16 %v390, %v383
    %v678 = vpack.c.bf16 %v391, %v384
    %v679 = vpack.c.bf16 %v399, %v392
    %v680 = vpack.c.bf16 %v400, %v393
    %v681 = vpack.c.bf16 %v401, %v394
    %v682 = vpack.c.bf16 %v402, %v395
    %v683 = vpack.c.bf16 %v403, %v396
    %v684 = vpack.c.bf16 %v404, %v397
    %v685 = vpack.c.bf16 %v405, %v398
    %v686 = vpack.c.bf16 %v413, %v406
    %v687 = vpack.c.bf16 %v414, %v407
    %v688 = vpack.c.bf16 %v415, %v408
    %v689 = vpack.c.bf16 %v416, %v409
    %v690 = vpack.c.bf16 %v417, %v410
    %v691 = vpack.c.bf16 %v418, %v411
    %v692 = vpack.c.bf16 %v419, %v412
    %v693 = vpack.c.bf16 %v427, %v420
    %v694 = vpack.c.bf16 %v428, %v421
    %v695 = vpack.c.bf16 %v429, %v422
    %v696 = vpack.c.bf16 %v430, %v423
    %v697 = vpack.c.bf16 %v431, %v424
    %v698 = vpack.c.bf16 %v432, %v425
    %v699 = vpack.c.bf16 %v433, %v426
    %v700 = vpack.c.bf16 %v441, %v434
    %v701 = vpack.c.bf16 %v442, %v435
    %v702 = vpack.c.bf16 %v443, %v436
    %v703 = vpack.c.bf16 %v444, %v437
    %v704 = vpack.c.bf16 %v445, %v438
    %v705 = vpack.c.bf16 %v446, %v439
    %v706 = vpack.c.bf16 %v447, %v440
    %v707 = vpack.c.bf16 %v455, %v448
    %v708 = vpack.c.bf16 %v456, %v449
    %v709 = vpack.c.bf16 %v457, %v450
    %v710 = vpack.c.bf16 %v458, %v451
    %v711 = vpack.c.bf16 %v459, %v452
    %v712 = vpack.c.bf16 %v460, %v453
    %v713 = vpack.c.bf16 %v461, %v454
    %v714 = vpack.c.bf16 %v469, %v462
    %v715 = vpack.c.bf16 %v470, %v463
    %v716 = vpack.c.bf16 %v471, %v464
    %v717 = vpack.c.bf16 %v472, %v465
    %v718 = vpack.c.bf16 %v473, %v466
    %v719 = vpack.c.bf16 %v474, %v467
    %v720 = vpack.c.bf16 %v475, %v468
    %v721 = vpack.c.bf16 %v483, %v476
    %v722 = vpack.c.bf16 %v484, %v477
    %v723 = vpack.c.bf16 %v485, %v478
    %v724 = vpack.c.bf16 %v486, %v479
    %v725 = vpack.c.bf16 %v487, %v480
    %v726 = vpack.c.bf16 %v488, %v481
    %v727 = vpack.c.bf16 %v489, %v482
    %v728 = vpack.c.bf16 %v497, %v490
    %v729 = vpack.c.bf16 %v498, %v491
    %v730 = vpack.c.bf16 %v499, %v492
    %v731 = vpack.c.bf16 %v500, %v493
    %v732 = vpack.c.bf16 %v501, %v494
    %v733 = vpack.c.bf16 %v502, %v495
    %v734 = vpack.c.bf16 %v503, %v496
    %v735 = vpack.c.bf16 %v511, %v504
    %v736 = vpack.c.bf16 %v512, %v505
    %v737 = vpack.c.bf16 %v513, %v506
    %v738 = vpack.c.bf16 %v514, %v507
    %v739 = vpack.c.bf16 %v515, %v508
    %v740 = vpack.c.bf16 %v516, %v509
    %v741 = vpack.c.bf16 %v517, %v510
    %v742 = vpack.c.bf16 %v525, %v518
    %v743 = vpack.c.bf16 %v526, %v519
    %v744 = vpack.c.bf16 %v527, %v520
    %v745 = vpack.c.bf16 %v528, %v521
    %v746 = vpack.c.bf16 %v529, %v522
    %v747 = vpack.c.bf16 %v530, %v523
    %v748 = vpack.c.bf16 %v531, %v524
    %v749 = vpack.c.bf16 %v539, %v532
    %v750 = vpack.c.bf16 %v540, %v533
    %v751 = vpack.c.bf16 %v541, %v534
    %v752 = vpack.c.bf16 %v542, %v535
    %v753 = vpack.c.bf16 %v543, %v536
    %v754 = vpack.c.bf16 %v544, %v537
    %v755 = vpack.c.bf16 %v545, %v538
    %vm756 = vcmask 785408
    %v758 = vsel %vm756, %v109, 0
    %v761 = vsel %vm756, %v113, 0
    %v764 = vsel %vm756, %v117, 0
    %v767 = vsel %vm756, %v121, 0
    %v770 = vsel %vm756, %v125, 0
    %772 = vmatpush.bf16.msra.mxu0 %v595
    %773 = vmatpush.bf16.msra.mxu0 %v588
    %774 = vmatpush.bf16.msra.mxu0 %v581
    %775 = vmatpush.bf16.msra.mxu0 %v574
    %776 = vmatpush.bf16.msra.mxu0 %v567
    %777 = vmatpush.bf16.msra.mxu0 %v560
    %778 = vmatpush.bf16.msra.mxu0 %v553
    %779 = vmatpush.bf16.msra.mxu0 %v546
    %780 = vmatmul.bf16.gmra.mxu0 %v106
    %v781 = vpop.f32.mrf.mxu0
    %v782 = vadd.f32 0.0, %v781
    %v783 = vpop.f32.mrf.mxu0
    %v784 = vadd.f32 0.0, %v783
    %785 = vmatmul.bf16.gmra.mxu0 %v110
    %v786 = vpop.f32.mrf.mxu0
    %v787 = vadd.f32 0.0, %v786
    %v788 = vpop.f32.mrf.mxu0
    %v789 = vadd.f32 0.0, %v788
    %790 = vmatmul.bf16.gmra.mxu0 %v114
    %v791 = vpop.f32.mrf.mxu0
    %v792 = vadd.f32 0.0, %v791
    %v793 = vpop.f32.mrf.mxu0
    %v794 = vadd.f32 0.0, %v793
    %795 = vmatmul.bf16.gmra.mxu0 %v118
    %v796 = vpop.f32.mrf.mxu0
    %v797 = vadd.f32 0.0, %v796
    %v798 = vpop.f32.mrf.mxu0
    %v799 = vadd.f32 0.0, %v798
    %800 = vmatmul.bf16.gmra.mxu0 %v122
    %v801 = vpop.f32.mrf.mxu0
    %v802 = vadd.f32 0.0, %v801
    %v803 = vpop.f32.mrf.mxu0
    %v804 = vadd.f32 0.0, %v803
    %805 = vdwg.mxu0
    %806 = vmatpush.bf16.msra.mxu0 %v651
    %807 = vmatpush.bf16.msra.mxu0 %v644
    %808 = vmatpush.bf16.msra.mxu0 %v637
    %809 = vmatpush.bf16.msra.mxu0 %v630
    %810 = vmatpush.bf16.msra.mxu0 %v623
    %811 = vmatpush.bf16.msra.mxu0 %v616
    %812 = vmatpush.bf16.msra.mxu0 %v609
    %813 = vmatpush.bf16.msra.mxu0 %v602
    %814 = vmatmul.bf16.gmra.mxu0 %v107
    %v815 = vpop.f32.mrf.mxu0
    %v816 = vadd.f32 %v782, %v815
    %v817 = vpop.f32.mrf.mxu0
    %v818 = vadd.f32 %v784, %v817
    %819 = vmatmul.bf16.gmra.mxu0 %v111
    %v820 = vpop.f32.mrf.mxu0
    %v821 = vadd.f32 %v787, %v820
    %v822 = vpop.f32.mrf.mxu0
    %v823 = vadd.f32 %v789, %v822
    %824 = vmatmul.bf16.gmra.mxu0 %v115
    %v825 = vpop.f32.mrf.mxu0
    %v826 = vadd.f32 %v792, %v825
    %v827 = vpop.f32.mrf.mxu0
    %v828 = vadd.f32 %v794, %v827
    %829 = vmatmul.bf16.gmra.mxu0 %v119
    %v830 = vpop.f32.mrf.mxu0
    %v831 = vadd.f32 %v797, %v830
    %v832 = vpop.f32.mrf.mxu0
    %v833 = vadd.f32 %v799, %v832
    %834 = vmatmul.bf16.gmra.mxu0 %v123
    %v835 = vpop.f32.mrf.mxu0
    %v836 = vadd.f32 %v802, %v835
    %v837 = vpop.f32.mrf.mxu0
    %v838 = vadd.f32 %v804, %v837
    %839 = vdwg.mxu0
    %840 = vmatpush.bf16.msra.mxu0 %v707
    %841 = vmatpush.bf16.msra.mxu0 %v700
    %842 = vmatpush.bf16.msra.mxu0 %v693
    %843 = vmatpush.bf16.msra.mxu0 %v686
    %844 = vmatpush.bf16.msra.mxu0 %v679
    %845 = vmatpush.bf16.msra.mxu0 %v672
    %846 = vmatpush.bf16.msra.mxu0 %v665
    %847 = vmatpush.bf16.msra.mxu0 %v658
    %848 = vmatmul.bf16.gmra.mxu0 %v108
    %v849 = vpop.f32.mrf.mxu0
    %v850 = vadd.f32 %v816, %v849
    %v851 = vpop.f32.mrf.mxu0
    %v852 = vadd.f32 %v818, %v851
    %853 = vmatmul.bf16.gmra.mxu0 %v112
    %v854 = vpop.f32.mrf.mxu0
    %v855 = vadd.f32 %v821, %v854
    %v856 = vpop.f32.mrf.mxu0
    %v857 = vadd.f32 %v823, %v856
    %858 = vmatmul.bf16.gmra.mxu0 %v116
    %v859 = vpop.f32.mrf.mxu0
    %v860 = vadd.f32 %v826, %v859
    %v861 = vpop.f32.mrf.mxu0
    %v862 = vadd.f32 %v828, %v861
    %863 = vmatmul.bf16.gmra.mxu0 %v120
    %v864 = vpop.f32.mrf.mxu0
    %v865 = vadd.f32 %v831, %v864
    %v866 = vpop.f32.mrf.mxu0
    %v867 = vadd.f32 %v833, %v866
    %868 = vmatmul.bf16.gmra.mxu0 %v124
    %v869 = vpop.f32.mrf.mxu0
    %v870 = vadd.f32 %v836, %v869
    %v871 = vpop.f32.mrf.mxu0
    %v872 = vadd.f32 %v838, %v871
    %873 = vdwg.mxu0
    %874 = vmatpush.bf16.msra.mxu0 0
    %875 = vmatpush.bf16.msra.mxu0 0
    %876 = vmatpush.bf16.msra.mxu0 %v749
    %877 = vmatpush.bf16.msra.mxu0 %v742
    %878 = vmatpush.bf16.msra.mxu0 %v735
    %879 = vmatpush.bf16.msra.mxu0 %v728
    %880 = vmatpush.bf16.msra.mxu0 %v721
    %881 = vmatpush.bf16.msra.mxu0 %v714
    %882 = vmatmul.bf16.gmra.mxu0 %v758
    %v883 = vpop.f32.mrf.mxu0
    %v884 = vadd.f32 %v850, %v883
    %v885 = vpop.f32.mrf.mxu0
    %v886 = vadd.f32 %v852, %v885
    %887 = vmatmul.bf16.gmra.mxu0 %v761
    %v888 = vpop.f32.mrf.mxu0
    %v889 = vadd.f32 %v855, %v888
    %v890 = vpop.f32.mrf.mxu0
    %v891 = vadd.f32 %v857, %v890
    %892 = vmatmul.bf16.gmra.mxu0 %v764
    %v893 = vpop.f32.mrf.mxu0
    %v894 = vadd.f32 %v860, %v893
    %v895 = vpop.f32.mrf.mxu0
    %v896 = vadd.f32 %v862, %v895
    %897 = vmatmul.bf16.gmra.mxu0 %v767
    %v898 = vpop.f32.mrf.mxu0
    %v899 = vadd.f32 %v865, %v898
    %v900 = vpop.f32.mrf.mxu0
    %v901 = vadd.f32 %v867, %v900
    %902 = vmatmul.bf16.gmra.mxu0 %v770
    %v903 = vpop.f32.mrf.mxu0
    %v904 = vadd.f32 %v870, %v903
    %v905 = vpop.f32.mrf.mxu0
    %v906 = vadd.f32 %v872, %v905
    %907 = vdwg.mxu0
    %908 = vmatpush.bf16.msra.mxu0 %v596
    %909 = vmatpush.bf16.msra.mxu0 %v589
    %910 = vmatpush.bf16.msra.mxu0 %v582
    %911 = vmatpush.bf16.msra.mxu0 %v575
    %912 = vmatpush.bf16.msra.mxu0 %v568
    %913 = vmatpush.bf16.msra.mxu0 %v561
    %914 = vmatpush.bf16.msra.mxu0 %v554
    %915 = vmatpush.bf16.msra.mxu0 %v547
    %916 = vmatmul.bf16.gmra.mxu0 %v106
    %v917 = vpop.f32.mrf.mxu0
    %v918 = vadd.f32 0.0, %v917
    %v919 = vpop.f32.mrf.mxu0
    %v920 = vadd.f32 0.0, %v919
    %921 = vmatmul.bf16.gmra.mxu0 %v110
    %v922 = vpop.f32.mrf.mxu0
    %v923 = vadd.f32 0.0, %v922
    %v924 = vpop.f32.mrf.mxu0
    %v925 = vadd.f32 0.0, %v924
    %926 = vmatmul.bf16.gmra.mxu0 %v114
    %v927 = vpop.f32.mrf.mxu0
    %v928 = vadd.f32 0.0, %v927
    %v929 = vpop.f32.mrf.mxu0
    %v930 = vadd.f32 0.0, %v929
    %931 = vmatmul.bf16.gmra.mxu0 %v118
    %v932 = vpop.f32.mrf.mxu0
    %v933 = vadd.f32 0.0, %v932
    %v934 = vpop.f32.mrf.mxu0
    %v935 = vadd.f32 0.0, %v934
    %936 = vmatmul.bf16.gmra.mxu0 %v122
    %v937 = vpop.f32.mrf.mxu0
    %v938 = vadd.f32 0.0, %v937
    %v939 = vpop.f32.mrf.mxu0
    %v940 = vadd.f32 0.0, %v939
    %941 = vdwg.mxu0
    %942 = vmatpush.bf16.msra.mxu0 %v652
    %943 = vmatpush.bf16.msra.mxu0 %v645
    %944 = vmatpush.bf16.msra.mxu0 %v638
    %945 = vmatpush.bf16.msra.mxu0 %v631
    %946 = vmatpush.bf16.msra.mxu0 %v624
    %947 = vmatpush.bf16.msra.mxu0 %v617
    %948 = vmatpush.bf16.msra.mxu0 %v610
    %949 = vmatpush.bf16.msra.mxu0 %v603
    %950 = vmatmul.bf16.gmra.mxu0 %v107
    %v951 = vpop.f32.mrf.mxu0
    %v952 = vadd.f32 %v918, %v951
    %v953 = vpop.f32.mrf.mxu0
    %v954 = vadd.f32 %v920, %v953
    %955 = vmatmul.bf16.gmra.mxu0 %v111
    %v956 = vpop.f32.mrf.mxu0
    %v957 = vadd.f32 %v923, %v956
    %v958 = vpop.f32.mrf.mxu0
    %v959 = vadd.f32 %v925, %v958
    %960 = vmatmul.bf16.gmra.mxu0 %v115
    %v961 = vpop.f32.mrf.mxu0
    %v962 = vadd.f32 %v928, %v961
    %v963 = vpop.f32.mrf.mxu0
    %v964 = vadd.f32 %v930, %v963
    %965 = vmatmul.bf16.gmra.mxu0 %v119
    %v966 = vpop.f32.mrf.mxu0
    %v967 = vadd.f32 %v933, %v966
    %v968 = vpop.f32.mrf.mxu0
    %v969 = vadd.f32 %v935, %v968
    %970 = vmatmul.bf16.gmra.mxu0 %v123
    %v971 = vpop.f32.mrf.mxu0
    %v972 = vadd.f32 %v938, %v971
    %v973 = vpop.f32.mrf.mxu0
    %v974 = vadd.f32 %v940, %v973
    %975 = vdwg.mxu0
    %976 = vmatpush.bf16.msra.mxu0 %v708
    %977 = vmatpush.bf16.msra.mxu0 %v701
    %978 = vmatpush.bf16.msra.mxu0 %v694
    %979 = vmatpush.bf16.msra.mxu0 %v687
    %980 = vmatpush.bf16.msra.mxu0 %v680
    %981 = vmatpush.bf16.msra.mxu0 %v673
    %982 = vmatpush.bf16.msra.mxu0 %v666
    %983 = vmatpush.bf16.msra.mxu0 %v659
    %984 = vmatmul.bf16.gmra.mxu0 %v108
    %v985 = vpop.f32.mrf.mxu0
    %v986 = vadd.f32 %v952, %v985
    %v987 = vpop.f32.mrf.mxu0
    %v988 = vadd.f32 %v954, %v987
    %989 = vmatmul.bf16.gmra.mxu0 %v112
    %v990 = vpop.f32.mrf.mxu0
    %v991 = vadd.f32 %v957, %v990
    %v992 = vpop.f32.mrf.mxu0
    %v993 = vadd.f32 %v959, %v992
    %994 = vmatmul.bf16.gmra.mxu0 %v116
    %v995 = vpop.f32.mrf.mxu0
    %v996 = vadd.f32 %v962, %v995
    %v997 = vpop.f32.mrf.mxu0
    %v998 = vadd.f32 %v964, %v997
    %999 = vmatmul.bf16.gmra.mxu0 %v120
    %v1000 = vpop.f32.mrf.mxu0
    %v1001 = vadd.f32 %v967, %v1000
    %v1002 = vpop.f32.mrf.mxu0
    %v1003 = vadd.f32 %v969, %v1002
    %1004 = vmatmul.bf16.gmra.mxu0 %v124
    %v1005 = vpop.f32.mrf.mxu0
    %v1006 = vadd.f32 %v972, %v1005
    %v1007 = vpop.f32.mrf.mxu0
    %v1008 = vadd.f32 %v974, %v1007
    %1009 = vdwg.mxu0
    %1010 = vmatpush.bf16.msra.mxu0 0
    %1011 = vmatpush.bf16.msra.mxu0 0
    %1012 = vmatpush.bf16.msra.mxu0 %v750
    %1013 = vmatpush.bf16.msra.mxu0 %v743
    %1014 = vmatpush.bf16.msra.mxu0 %v736
    %1015 = vmatpush.bf16.msra.mxu0 %v729
    %1016 = vmatpush.bf16.msra.mxu0 %v722
    %1017 = vmatpush.bf16.msra.mxu0 %v715
    %1018 = vmatmul.bf16.gmra.mxu0 %v758
    %v1019 = vpop.f32.mrf.mxu0
    %v1020 = vadd.f32 %v986, %v1019
    %v1021 = vpop.f32.mrf.mxu0
    %v1022 = vadd.f32 %v988, %v1021
    %1023 = vmatmul.bf16.gmra.mxu0 %v761
    %v1024 = vpop.f32.mrf.mxu0
    %v1025 = vadd.f32 %v991, %v1024
    %v1026 = vpop.f32.mrf.mxu0
    %v1027 = vadd.f32 %v993, %v1026
    %1028 = vmatmul.bf16.gmra.mxu0 %v764
    %v1029 = vpop.f32.mrf.mxu0
    %v1030 = vadd.f32 %v996, %v1029
    %v1031 = vpop.f32.mrf.mxu0
    %v1032 = vadd.f32 %v998, %v1031
    %1033 = vmatmul.bf16.gmra.mxu0 %v767
    %v1034 = vpop.f32.mrf.mxu0
    %v1035 = vadd.f32 %v1001, %v1034
    %v1036 = vpop.f32.mrf.mxu0
    %v1037 = vadd.f32 %v1003, %v1036
    %1038 = vmatmul.bf16.gmra.mxu0 %v770
    %v1039 = vpop.f32.mrf.mxu0
    %v1040 = vadd.f32 %v1006, %v1039
    %v1041 = vpop.f32.mrf.mxu0
    %v1042 = vadd.f32 %v1008, %v1041
    %1043 = vdwg.mxu0
    %1044 = vmatpush.bf16.msra.mxu0 %v597
    %1045 = vmatpush.bf16.msra.mxu0 %v590
    %1046 = vmatpush.bf16.msra.mxu0 %v583
    %1047 = vmatpush.bf16.msra.mxu0 %v576
    %1048 = vmatpush.bf16.msra.mxu0 %v569
    %1049 = vmatpush.bf16.msra.mxu0 %v562
    %1050 = vmatpush.bf16.msra.mxu0 %v555
    %1051 = vmatpush.bf16.msra.mxu0 %v548
    %1052 = vmatmul.bf16.gmra.mxu0 %v106
    %v1053 = vpop.f32.mrf.mxu0
    %v1054 = vadd.f32 0.0, %v1053
    %v1055 = vpop.f32.mrf.mxu0
    %v1056 = vadd.f32 0.0, %v1055
    %1057 = vmatmul.bf16.gmra.mxu0 %v110
    %v1058 = vpop.f32.mrf.mxu0
    %v1059 = vadd.f32 0.0, %v1058
    %v1060 = vpop.f32.mrf.mxu0
    %v1061 = vadd.f32 0.0, %v1060
    %1062 = vmatmul.bf16.gmra.mxu0 %v114
    %v1063 = vpop.f32.mrf.mxu0
    %v1064 = vadd.f32 0.0, %v1063
    %v1065 = vpop.f32.mrf.mxu0
    %v1066 = vadd.f32 0.0, %v1065
    %1067 = vmatmul.bf16.gmra.mxu0 %v118
    %v1068 = vpop.f32.mrf.mxu0
    %v1069 = vadd.f32 0.0, %v1068
    %v1070 = vpop.f32.mrf.mxu0
    %v1071 = vadd.f32 0.0, %v1070
    %1072 = vmatmul.bf16.gmra.mxu0 %v122
    %v1073 = vpop.f32.mrf.mxu0
    %v1074 = vadd.f32 0.0, %v1073
    %v1075 = vpop.f32.mrf.mxu0
    %v1076 = vadd.f32 0.0, %v1075
    %1077 = vdwg.mxu0
    %1078 = vmatpush.bf16.msra.mxu0 %v653
    %1079 = vmatpush.bf16.msra.mxu0 %v646
    %1080 = vmatpush.bf16.msra.mxu0 %v639
    %1081 = vmatpush.bf16.msra.mxu0 %v632
    %1082 = vmatpush.bf16.msra.mxu0 %v625
    %1083 = vmatpush.bf16.msra.mxu0 %v618
    %1084 = vmatpush.bf16.msra.mxu0 %v611
    %1085 = vmatpush.bf16.msra.mxu0 %v604
    %1086 = vmatmul.bf16.gmra.mxu0 %v107
    %v1087 = vpop.f32.mrf.mxu0
    %v1088 = vadd.f32 %v1054, %v1087
    %v1089 = vpop.f32.mrf.mxu0
    %v1090 = vadd.f32 %v1056, %v1089
    %1091 = vmatmul.bf16.gmra.mxu0 %v111
    %v1092 = vpop.f32.mrf.mxu0
    %v1093 = vadd.f32 %v1059, %v1092
    %v1094 = vpop.f32.mrf.mxu0
    %v1095 = vadd.f32 %v1061, %v1094
    %1096 = vmatmul.bf16.gmra.mxu0 %v115
    %v1097 = vpop.f32.mrf.mxu0
    %v1098 = vadd.f32 %v1064, %v1097
    %v1099 = vpop.f32.mrf.mxu0
    %v1100 = vadd.f32 %v1066, %v1099
    %1101 = vmatmul.bf16.gmra.mxu0 %v119
    %v1102 = vpop.f32.mrf.mxu0
    %v1103 = vadd.f32 %v1069, %v1102
    %v1104 = vpop.f32.mrf.mxu0
    %v1105 = vadd.f32 %v1071, %v1104
    %1106 = vmatmul.bf16.gmra.mxu0 %v123
    %v1107 = vpop.f32.mrf.mxu0
    %v1108 = vadd.f32 %v1074, %v1107
    %v1109 = vpop.f32.mrf.mxu0
    %v1110 = vadd.f32 %v1076, %v1109
    %1111 = vdwg.mxu0
    %1112 = vmatpush.bf16.msra.mxu0 %v709
    %1113 = vmatpush.bf16.msra.mxu0 %v702
    %1114 = vmatpush.bf16.msra.mxu0 %v695
    %1115 = vmatpush.bf16.msra.mxu0 %v688
    %1116 = vmatpush.bf16.msra.mxu0 %v681
    %1117 = vmatpush.bf16.msra.mxu0 %v674
    %1118 = vmatpush.bf16.msra.mxu0 %v667
    %1119 = vmatpush.bf16.msra.mxu0 %v660
    %1120 = vmatmul.bf16.gmra.mxu0 %v108
    %v1121 = vpop.f32.mrf.mxu0
    %v1122 = vadd.f32 %v1088, %v1121
    %v1123 = vpop.f32.mrf.mxu0
    %v1124 = vadd.f32 %v1090, %v1123
    %1125 = vmatmul.bf16.gmra.mxu0 %v112
    %v1126 = vpop.f32.mrf.mxu0
    %v1127 = vadd.f32 %v1093, %v1126
    %v1128 = vpop.f32.mrf.mxu0
    %v1129 = vadd.f32 %v1095, %v1128
    %1130 = vmatmul.bf16.gmra.mxu0 %v116
    %v1131 = vpop.f32.mrf.mxu0
    %v1132 = vadd.f32 %v1098, %v1131
    %v1133 = vpop.f32.mrf.mxu0
    %v1134 = vadd.f32 %v1100, %v1133
    %1135 = vmatmul.bf16.gmra.mxu0 %v120
    %v1136 = vpop.f32.mrf.mxu0
    %v1137 = vadd.f32 %v1103, %v1136
    %v1138 = vpop.f32.mrf.mxu0
    %v1139 = vadd.f32 %v1105, %v1138
    %1140 = vmatmul.bf16.gmra.mxu0 %v124
    %v1141 = vpop.f32.mrf.mxu0
    %v1142 = vadd.f32 %v1108, %v1141
    %v1143 = vpop.f32.mrf.mxu0
    %v1144 = vadd.f32 %v1110, %v1143
    %1145 = vdwg.mxu0
    %1146 = vmatpush.bf16.msra.mxu0 0
    %1147 = vmatpush.bf16.msra.mxu0 0
    %1148 = vmatpush.bf16.msra.mxu0 %v751
    %1149 = vmatpush.bf16.msra.mxu0 %v744
    %1150 = vmatpush.bf16.msra.mxu0 %v737
    %1151 = vmatpush.bf16.msra.mxu0 %v730
    %1152 = vmatpush.bf16.msra.mxu0 %v723
    %1153 = vmatpush.bf16.msra.mxu0 %v716
    %1154 = vmatmul.bf16.gmra.mxu0 %v758
    %v1155 = vpop.f32.mrf.mxu0
    %v1156 = vadd.f32 %v1122, %v1155
    %v1157 = vpop.f32.mrf.mxu0
    %v1158 = vadd.f32 %v1124, %v1157
    %1159 = vmatmul.bf16.gmra.mxu0 %v761
    %v1160 = vpop.f32.mrf.mxu0
    %v1161 = vadd.f32 %v1127, %v1160
    %v1162 = vpop.f32.mrf.mxu0
    %v1163 = vadd.f32 %v1129, %v1162
    %1164 = vmatmul.bf16.gmra.mxu0 %v764
    %v1165 = vpop.f32.mrf.mxu0
    %v1166 = vadd.f32 %v1132, %v1165
    %v1167 = vpop.f32.mrf.mxu0
    %v1168 = vadd.f32 %v1134, %v1167
    %1169 = vmatmul.bf16.gmra.mxu0 %v767
    %v1170 = vpop.f32.mrf.mxu0
    %v1171 = vadd.f32 %v1137, %v1170
    %v1172 = vpop.f32.mrf.mxu0
    %v1173 = vadd.f32 %v1139, %v1172
    %1174 = vmatmul.bf16.gmra.mxu0 %v770
    %v1175 = vpop.f32.mrf.mxu0
    %v1176 = vadd.f32 %v1142, %v1175
    %v1177 = vpop.f32.mrf.mxu0
    %v1178 = vadd.f32 %v1144, %v1177
    %1179 = vdwg.mxu0
    %1180 = vmatpush.bf16.msra.mxu0 %v598
    %1181 = vmatpush.bf16.msra.mxu0 %v591
    %1182 = vmatpush.bf16.msra.mxu0 %v584
    %1183 = vmatpush.bf16.msra.mxu0 %v577
    %1184 = vmatpush.bf16.msra.mxu0 %v570
    %1185 = vmatpush.bf16.msra.mxu0 %v563
    %1186 = vmatpush.bf16.msra.mxu0 %v556
    %1187 = vmatpush.bf16.msra.mxu0 %v549
    %1188 = vmatmul.bf16.gmra.mxu0 %v106
    %v1189 = vpop.f32.mrf.mxu0
    %v1190 = vadd.f32 0.0, %v1189
    %v1191 = vpop.f32.mrf.mxu0
    %v1192 = vadd.f32 0.0, %v1191
    %1193 = vmatmul.bf16.gmra.mxu0 %v110
    %v1194 = vpop.f32.mrf.mxu0
    %v1195 = vadd.f32 0.0, %v1194
    %v1196 = vpop.f32.mrf.mxu0
    %v1197 = vadd.f32 0.0, %v1196
    %1198 = vmatmul.bf16.gmra.mxu0 %v114
    %v1199 = vpop.f32.mrf.mxu0
    %v1200 = vadd.f32 0.0, %v1199
    %v1201 = vpop.f32.mrf.mxu0
    %v1202 = vadd.f32 0.0, %v1201
    %1203 = vmatmul.bf16.gmra.mxu0 %v118
    %v1204 = vpop.f32.mrf.mxu0
    %v1205 = vadd.f32 0.0, %v1204
    %v1206 = vpop.f32.mrf.mxu0
    %v1207 = vadd.f32 0.0, %v1206
    %1208 = vmatmul.bf16.gmra.mxu0 %v122
    %v1209 = vpop.f32.mrf.mxu0
    %v1210 = vadd.f32 0.0, %v1209
    %v1211 = vpop.f32.mrf.mxu0
    %v1212 = vadd.f32 0.0, %v1211
    %1213 = vdwg.mxu0
    %1214 = vmatpush.bf16.msra.mxu0 %v654
    %1215 = vmatpush.bf16.msra.mxu0 %v647
    %1216 = vmatpush.bf16.msra.mxu0 %v640
    %1217 = vmatpush.bf16.msra.mxu0 %v633
    %1218 = vmatpush.bf16.msra.mxu0 %v626
    %1219 = vmatpush.bf16.msra.mxu0 %v619
    %1220 = vmatpush.bf16.msra.mxu0 %v612
    %1221 = vmatpush.bf16.msra.mxu0 %v605
    %1222 = vmatmul.bf16.gmra.mxu0 %v107
    %v1223 = vpop.f32.mrf.mxu0
    %v1224 = vadd.f32 %v1190, %v1223
    %v1225 = vpop.f32.mrf.mxu0
    %v1226 = vadd.f32 %v1192, %v1225
    %1227 = vmatmul.bf16.gmra.mxu0 %v111
    %v1228 = vpop.f32.mrf.mxu0
    %v1229 = vadd.f32 %v1195, %v1228
    %v1230 = vpop.f32.mrf.mxu0
    %v1231 = vadd.f32 %v1197, %v1230
    %1232 = vmatmul.bf16.gmra.mxu0 %v115
    %v1233 = vpop.f32.mrf.mxu0
    %v1234 = vadd.f32 %v1200, %v1233
    %v1235 = vpop.f32.mrf.mxu0
    %v1236 = vadd.f32 %v1202, %v1235
    %1237 = vmatmul.bf16.gmra.mxu0 %v119
    %v1238 = vpop.f32.mrf.mxu0
    %v1239 = vadd.f32 %v1205, %v1238
    %v1240 = vpop.f32.mrf.mxu0
    %v1241 = vadd.f32 %v1207, %v1240
    %1242 = vmatmul.bf16.gmra.mxu0 %v123
    %v1243 = vpop.f32.mrf.mxu0
    %v1244 = vadd.f32 %v1210, %v1243
    %v1245 = vpop.f32.mrf.mxu0
    %v1246 = vadd.f32 %v1212, %v1245
    %1247 = vdwg.mxu0
    %1248 = vmatpush.bf16.msra.mxu0 %v710
    %1249 = vmatpush.bf16.msra.mxu0 %v703
    %1250 = vmatpush.bf16.msra.mxu0 %v696
    %1251 = vmatpush.bf16.msra.mxu0 %v689
    %1252 = vmatpush.bf16.msra.mxu0 %v682
    %1253 = vmatpush.bf16.msra.mxu0 %v675
    %1254 = vmatpush.bf16.msra.mxu0 %v668
    %1255 = vmatpush.bf16.msra.mxu0 %v661
    %1256 = vmatmul.bf16.gmra.mxu0 %v108
    %v1257 = vpop.f32.mrf.mxu0
    %v1258 = vadd.f32 %v1224, %v1257
    %v1259 = vpop.f32.mrf.mxu0
    %v1260 = vadd.f32 %v1226, %v1259
    %1261 = vmatmul.bf16.gmra.mxu0 %v112
    %v1262 = vpop.f32.mrf.mxu0
    %v1263 = vadd.f32 %v1229, %v1262
    %v1264 = vpop.f32.mrf.mxu0
    %v1265 = vadd.f32 %v1231, %v1264
    %1266 = vmatmul.bf16.gmra.mxu0 %v116
    %v1267 = vpop.f32.mrf.mxu0
    %v1268 = vadd.f32 %v1234, %v1267
    %v1269 = vpop.f32.mrf.mxu0
    %v1270 = vadd.f32 %v1236, %v1269
    %1271 = vmatmul.bf16.gmra.mxu0 %v120
    %v1272 = vpop.f32.mrf.mxu0
    %v1273 = vadd.f32 %v1239, %v1272
    %v1274 = vpop.f32.mrf.mxu0
    %v1275 = vadd.f32 %v1241, %v1274
    %1276 = vmatmul.bf16.gmra.mxu0 %v124
    %v1277 = vpop.f32.mrf.mxu0
    %v1278 = vadd.f32 %v1244, %v1277
    %v1279 = vpop.f32.mrf.mxu0
    %v1280 = vadd.f32 %v1246, %v1279
    %1281 = vdwg.mxu0
    %1282 = vmatpush.bf16.msra.mxu0 0
    %1283 = vmatpush.bf16.msra.mxu0 0
    %1284 = vmatpush.bf16.msra.mxu0 %v752
    %1285 = vmatpush.bf16.msra.mxu0 %v745
    %1286 = vmatpush.bf16.msra.mxu0 %v738
    %1287 = vmatpush.bf16.msra.mxu0 %v731
    %1288 = vmatpush.bf16.msra.mxu0 %v724
    %1289 = vmatpush.bf16.msra.mxu0 %v717
    %1290 = vmatmul.bf16.gmra.mxu0 %v758
    %v1291 = vpop.f32.mrf.mxu0
    %v1292 = vadd.f32 %v1258, %v1291
    %v1293 = vpop.f32.mrf.mxu0
    %v1294 = vadd.f32 %v1260, %v1293
    %1295 = vmatmul.bf16.gmra.mxu0 %v761
    %v1296 = vpop.f32.mrf.mxu0
    %v1297 = vadd.f32 %v1263, %v1296
    %v1298 = vpop.f32.mrf.mxu0
    %v1299 = vadd.f32 %v1265, %v1298
    %1300 = vmatmul.bf16.gmra.mxu0 %v764
    %v1301 = vpop.f32.mrf.mxu0
    %v1302 = vadd.f32 %v1268, %v1301
    %v1303 = vpop.f32.mrf.mxu0
    %v1304 = vadd.f32 %v1270, %v1303
    %1305 = vmatmul.bf16.gmra.mxu0 %v767
    %v1306 = vpop.f32.mrf.mxu0
    %v1307 = vadd.f32 %v1273, %v1306
    %v1308 = vpop.f32.mrf.mxu0
    %v1309 = vadd.f32 %v1275, %v1308
    %1310 = vmatmul.bf16.gmra.mxu0 %v770
    %v1311 = vpop.f32.mrf.mxu0
    %v1312 = vadd.f32 %v1278, %v1311
    %v1313 = vpop.f32.mrf.mxu0
    %v1314 = vadd.f32 %v1280, %v1313
    %1315 = vdwg.mxu0
    %1316 = vmatpush.bf16.msra.mxu0 %v599
    %1317 = vmatpush.bf16.msra.mxu0 %v592
    %1318 = vmatpush.bf16.msra.mxu0 %v585
    %1319 = vmatpush.bf16.msra.mxu0 %v578
    %1320 = vmatpush.bf16.msra.mxu0 %v571
    %1321 = vmatpush.bf16.msra.mxu0 %v564
    %1322 = vmatpush.bf16.msra.mxu0 %v557
    %1323 = vmatpush.bf16.msra.mxu0 %v550
    %1324 = vmatmul.bf16.gmra.mxu0 %v106
    %v1325 = vpop.f32.mrf.mxu0
    %v1326 = vadd.f32 0.0, %v1325
    %v1327 = vpop.f32.mrf.mxu0
    %v1328 = vadd.f32 0.0, %v1327
    %1329 = vmatmul.bf16.gmra.mxu0 %v110
    %v1330 = vpop.f32.mrf.mxu0
    %v1331 = vadd.f32 0.0, %v1330
    %v1332 = vpop.f32.mrf.mxu0
    %v1333 = vadd.f32 0.0, %v1332
    %1334 = vmatmul.bf16.gmra.mxu0 %v114
    %v1335 = vpop.f32.mrf.mxu0
    %v1336 = vadd.f32 0.0, %v1335
    %v1337 = vpop.f32.mrf.mxu0
    %v1338 = vadd.f32 0.0, %v1337
    %1339 = vmatmul.bf16.gmra.mxu0 %v118
    %v1340 = vpop.f32.mrf.mxu0
    %v1341 = vadd.f32 0.0, %v1340
    %v1342 = vpop.f32.mrf.mxu0
    %v1343 = vadd.f32 0.0, %v1342
    %1344 = vmatmul.bf16.gmra.mxu0 %v122
    %v1345 = vpop.f32.mrf.mxu0
    %v1346 = vadd.f32 0.0, %v1345
    %v1347 = vpop.f32.mrf.mxu0
    %v1348 = vadd.f32 0.0, %v1347
    %1349 = vdwg.mxu0
    %1350 = vmatpush.bf16.msra.mxu0 %v655
    %1351 = vmatpush.bf16.msra.mxu0 %v648
    %1352 = vmatpush.bf16.msra.mxu0 %v641
    %1353 = vmatpush.bf16.msra.mxu0 %v634
    %1354 = vmatpush.bf16.msra.mxu0 %v627
    %1355 = vmatpush.bf16.msra.mxu0 %v620
    %1356 = vmatpush.bf16.msra.mxu0 %v613
    %1357 = vmatpush.bf16.msra.mxu0 %v606
    %1358 = vmatmul.bf16.gmra.mxu0 %v107
    %v1359 = vpop.f32.mrf.mxu0
    %v1360 = vadd.f32 %v1326, %v1359
    %v1361 = vpop.f32.mrf.mxu0
    %v1362 = vadd.f32 %v1328, %v1361
    %1363 = vmatmul.bf16.gmra.mxu0 %v111
    %v1364 = vpop.f32.mrf.mxu0
    %v1365 = vadd.f32 %v1331, %v1364
    %v1366 = vpop.f32.mrf.mxu0
    %v1367 = vadd.f32 %v1333, %v1366
    %1368 = vmatmul.bf16.gmra.mxu0 %v115
    %v1369 = vpop.f32.mrf.mxu0
    %v1370 = vadd.f32 %v1336, %v1369
    %v1371 = vpop.f32.mrf.mxu0
    %v1372 = vadd.f32 %v1338, %v1371
    %1373 = vmatmul.bf16.gmra.mxu0 %v119
    %v1374 = vpop.f32.mrf.mxu0
    %v1375 = vadd.f32 %v1341, %v1374
    %v1376 = vpop.f32.mrf.mxu0
    %v1377 = vadd.f32 %v1343, %v1376
    %1378 = vmatmul.bf16.gmra.mxu0 %v123
    %v1379 = vpop.f32.mrf.mxu0
    %v1380 = vadd.f32 %v1346, %v1379
    %v1381 = vpop.f32.mrf.mxu0
    %v1382 = vadd.f32 %v1348, %v1381
    %1383 = vdwg.mxu0
    %1384 = vmatpush.bf16.msra.mxu0 %v711
    %1385 = vmatpush.bf16.msra.mxu0 %v704
    %1386 = vmatpush.bf16.msra.mxu0 %v697
    %1387 = vmatpush.bf16.msra.mxu0 %v690
    %1388 = vmatpush.bf16.msra.mxu0 %v683
    %1389 = vmatpush.bf16.msra.mxu0 %v676
    %1390 = vmatpush.bf16.msra.mxu0 %v669
    %1391 = vmatpush.bf16.msra.mxu0 %v662
    %1392 = vmatmul.bf16.gmra.mxu0 %v108
    %v1393 = vpop.f32.mrf.mxu0
    %v1394 = vadd.f32 %v1360, %v1393
    %v1395 = vpop.f32.mrf.mxu0
    %v1396 = vadd.f32 %v1362, %v1395
    %1397 = vmatmul.bf16.gmra.mxu0 %v112
    %v1398 = vpop.f32.mrf.mxu0
    %v1399 = vadd.f32 %v1365, %v1398
    %v1400 = vpop.f32.mrf.mxu0
    %v1401 = vadd.f32 %v1367, %v1400
    %1402 = vmatmul.bf16.gmra.mxu0 %v116
    %v1403 = vpop.f32.mrf.mxu0
    %v1404 = vadd.f32 %v1370, %v1403
    %v1405 = vpop.f32.mrf.mxu0
    %v1406 = vadd.f32 %v1372, %v1405
    %1407 = vmatmul.bf16.gmra.mxu0 %v120
    %v1408 = vpop.f32.mrf.mxu0
    %v1409 = vadd.f32 %v1375, %v1408
    %v1410 = vpop.f32.mrf.mxu0
    %v1411 = vadd.f32 %v1377, %v1410
    %1412 = vmatmul.bf16.gmra.mxu0 %v124
    %v1413 = vpop.f32.mrf.mxu0
    %v1414 = vadd.f32 %v1380, %v1413
    %v1415 = vpop.f32.mrf.mxu0
    %v1416 = vadd.f32 %v1382, %v1415
    %1417 = vdwg.mxu0
    %1418 = vmatpush.bf16.msra.mxu0 0
    %1419 = vmatpush.bf16.msra.mxu0 0
    %1420 = vmatpush.bf16.msra.mxu0 %v753
    %1421 = vmatpush.bf16.msra.mxu0 %v746
    %1422 = vmatpush.bf16.msra.mxu0 %v739
    %1423 = vmatpush.bf16.msra.mxu0 %v732
    %1424 = vmatpush.bf16.msra.mxu0 %v725
    %1425 = vmatpush.bf16.msra.mxu0 %v718
    %1426 = vmatmul.bf16.gmra.mxu0 %v758
    %v1427 = vpop.f32.mrf.mxu0
    %v1428 = vadd.f32 %v1394, %v1427
    %v1429 = vpop.f32.mrf.mxu0
    %v1430 = vadd.f32 %v1396, %v1429
    %1431 = vmatmul.bf16.gmra.mxu0 %v761
    %v1432 = vpop.f32.mrf.mxu0
    %v1433 = vadd.f32 %v1399, %v1432
    %v1434 = vpop.f32.mrf.mxu0
    %v1435 = vadd.f32 %v1401, %v1434
    %1436 = vmatmul.bf16.gmra.mxu0 %v764
    %v1437 = vpop.f32.mrf.mxu0
    %v1438 = vadd.f32 %v1404, %v1437
    %v1439 = vpop.f32.mrf.mxu0
    %v1440 = vadd.f32 %v1406, %v1439
    %1441 = vmatmul.bf16.gmra.mxu0 %v767
    %v1442 = vpop.f32.mrf.mxu0
    %v1443 = vadd.f32 %v1409, %v1442
    %v1444 = vpop.f32.mrf.mxu0
    %v1445 = vadd.f32 %v1411, %v1444
    %1446 = vmatmul.bf16.gmra.mxu0 %v770
    %v1447 = vpop.f32.mrf.mxu0
    %v1448 = vadd.f32 %v1414, %v1447
    %v1449 = vpop.f32.mrf.mxu0
    %v1450 = vadd.f32 %v1416, %v1449
    %1451 = vdwg.mxu0
    %1452 = vmatpush.bf16.msra.mxu0 %v600
    %1453 = vmatpush.bf16.msra.mxu0 %v593
    %1454 = vmatpush.bf16.msra.mxu0 %v586
    %1455 = vmatpush.bf16.msra.mxu0 %v579
    %1456 = vmatpush.bf16.msra.mxu0 %v572
    %1457 = vmatpush.bf16.msra.mxu0 %v565
    %1458 = vmatpush.bf16.msra.mxu0 %v558
    %1459 = vmatpush.bf16.msra.mxu0 %v551
    %1460 = vmatmul.bf16.gmra.mxu0 %v106
    %v1461 = vpop.f32.mrf.mxu0
    %v1462 = vadd.f32 0.0, %v1461
    %v1463 = vpop.f32.mrf.mxu0
    %v1464 = vadd.f32 0.0, %v1463
    %1465 = vmatmul.bf16.gmra.mxu0 %v110
    %v1466 = vpop.f32.mrf.mxu0
    %v1467 = vadd.f32 0.0, %v1466
    %v1468 = vpop.f32.mrf.mxu0
    %v1469 = vadd.f32 0.0, %v1468
    %1470 = vmatmul.bf16.gmra.mxu0 %v114
    %v1471 = vpop.f32.mrf.mxu0
    %v1472 = vadd.f32 0.0, %v1471
    %v1473 = vpop.f32.mrf.mxu0
    %v1474 = vadd.f32 0.0, %v1473
    %1475 = vmatmul.bf16.gmra.mxu0 %v118
    %v1476 = vpop.f32.mrf.mxu0
    %v1477 = vadd.f32 0.0, %v1476
    %v1478 = vpop.f32.mrf.mxu0
    %v1479 = vadd.f32 0.0, %v1478
    %1480 = vmatmul.bf16.gmra.mxu0 %v122
    %v1481 = vpop.f32.mrf.mxu0
    %v1482 = vadd.f32 0.0, %v1481
    %v1483 = vpop.f32.mrf.mxu0
    %v1484 = vadd.f32 0.0, %v1483
    %1485 = vdwg.mxu0
    %1486 = vmatpush.bf16.msra.mxu0 %v656
    %1487 = vmatpush.bf16.msra.mxu0 %v649
    %1488 = vmatpush.bf16.msra.mxu0 %v642
    %1489 = vmatpush.bf16.msra.mxu0 %v635
    %1490 = vmatpush.bf16.msra.mxu0 %v628
    %1491 = vmatpush.bf16.msra.mxu0 %v621
    %1492 = vmatpush.bf16.msra.mxu0 %v614
    %1493 = vmatpush.bf16.msra.mxu0 %v607
    %1494 = vmatmul.bf16.gmra.mxu0 %v107
    %v1495 = vpop.f32.mrf.mxu0
    %v1496 = vadd.f32 %v1462, %v1495
    %v1497 = vpop.f32.mrf.mxu0
    %v1498 = vadd.f32 %v1464, %v1497
    %1499 = vmatmul.bf16.gmra.mxu0 %v111
    %v1500 = vpop.f32.mrf.mxu0
    %v1501 = vadd.f32 %v1467, %v1500
    %v1502 = vpop.f32.mrf.mxu0
    %v1503 = vadd.f32 %v1469, %v1502
    %1504 = vmatmul.bf16.gmra.mxu0 %v115
    %v1505 = vpop.f32.mrf.mxu0
    %v1506 = vadd.f32 %v1472, %v1505
    %v1507 = vpop.f32.mrf.mxu0
    %v1508 = vadd.f32 %v1474, %v1507
    %1509 = vmatmul.bf16.gmra.mxu0 %v119
    %v1510 = vpop.f32.mrf.mxu0
    %v1511 = vadd.f32 %v1477, %v1510
    %v1512 = vpop.f32.mrf.mxu0
    %v1513 = vadd.f32 %v1479, %v1512
    %1514 = vmatmul.bf16.gmra.mxu0 %v123
    %v1515 = vpop.f32.mrf.mxu0
    %v1516 = vadd.f32 %v1482, %v1515
    %v1517 = vpop.f32.mrf.mxu0
    %v1518 = vadd.f32 %v1484, %v1517
    %1519 = vdwg.mxu0
    %1520 = vmatpush.bf16.msra.mxu0 %v712
    %1521 = vmatpush.bf16.msra.mxu0 %v705
    %1522 = vmatpush.bf16.msra.mxu0 %v698
    %1523 = vmatpush.bf16.msra.mxu0 %v691
    %1524 = vmatpush.bf16.msra.mxu0 %v684
    %1525 = vmatpush.bf16.msra.mxu0 %v677
    %1526 = vmatpush.bf16.msra.mxu0 %v670
    %1527 = vmatpush.bf16.msra.mxu0 %v663
    %1528 = vmatmul.bf16.gmra.mxu0 %v108
    %v1529 = vpop.f32.mrf.mxu0
    %v1530 = vadd.f32 %v1496, %v1529
    %v1531 = vpop.f32.mrf.mxu0
    %v1532 = vadd.f32 %v1498, %v1531
    %1533 = vmatmul.bf16.gmra.mxu0 %v112
    %v1534 = vpop.f32.mrf.mxu0
    %v1535 = vadd.f32 %v1501, %v1534
    %v1536 = vpop.f32.mrf.mxu0
    %v1537 = vadd.f32 %v1503, %v1536
    %1538 = vmatmul.bf16.gmra.mxu0 %v116
    %v1539 = vpop.f32.mrf.mxu0
    %v1540 = vadd.f32 %v1506, %v1539
    %v1541 = vpop.f32.mrf.mxu0
    %v1542 = vadd.f32 %v1508, %v1541
    %1543 = vmatmul.bf16.gmra.mxu0 %v120
    %v1544 = vpop.f32.mrf.mxu0
    %v1545 = vadd.f32 %v1511, %v1544
    %v1546 = vpop.f32.mrf.mxu0
    %v1547 = vadd.f32 %v1513, %v1546
    %1548 = vmatmul.bf16.gmra.mxu0 %v124
    %v1549 = vpop.f32.mrf.mxu0
    %v1550 = vadd.f32 %v1516, %v1549
    %v1551 = vpop.f32.mrf.mxu0
    %v1552 = vadd.f32 %v1518, %v1551
    %1553 = vdwg.mxu0
    %1554 = vmatpush.bf16.msra.mxu0 0
    %1555 = vmatpush.bf16.msra.mxu0 0
    %1556 = vmatpush.bf16.msra.mxu0 %v754
    %1557 = vmatpush.bf16.msra.mxu0 %v747
    %1558 = vmatpush.bf16.msra.mxu0 %v740
    %1559 = vmatpush.bf16.msra.mxu0 %v733
    %1560 = vmatpush.bf16.msra.mxu0 %v726
    %1561 = vmatpush.bf16.msra.mxu0 %v719
    %1562 = vmatmul.bf16.gmra.mxu0 %v758
    %v1563 = vpop.f32.mrf.mxu0
    %v1564 = vadd.f32 %v1530, %v1563
    %v1565 = vpop.f32.mrf.mxu0
    %v1566 = vadd.f32 %v1532, %v1565
    %1567 = vmatmul.bf16.gmra.mxu0 %v761
    %v1568 = vpop.f32.mrf.mxu0
    %v1569 = vadd.f32 %v1535, %v1568
    %v1570 = vpop.f32.mrf.mxu0
    %v1571 = vadd.f32 %v1537, %v1570
    %1572 = vmatmul.bf16.gmra.mxu0 %v764
    %v1573 = vpop.f32.mrf.mxu0
    %v1574 = vadd.f32 %v1540, %v1573
    %v1575 = vpop.f32.mrf.mxu0
    %v1576 = vadd.f32 %v1542, %v1575
    %1577 = vmatmul.bf16.gmra.mxu0 %v767
    %v1578 = vpop.f32.mrf.mxu0
    %v1579 = vadd.f32 %v1545, %v1578
    %v1580 = vpop.f32.mrf.mxu0
    %v1581 = vadd.f32 %v1547, %v1580
    %1582 = vmatmul.bf16.gmra.mxu0 %v770
    %v1583 = vpop.f32.mrf.mxu0
    %v1584 = vadd.f32 %v1550, %v1583
    %v1585 = vpop.f32.mrf.mxu0
    %v1586 = vadd.f32 %v1552, %v1585
    %1587 = vdwg.mxu0
    %1588 = vmatpush.bf16.msra.mxu0 %v601
    %1589 = vmatpush.bf16.msra.mxu0 %v594
    %1590 = vmatpush.bf16.msra.mxu0 %v587
    %1591 = vmatpush.bf16.msra.mxu0 %v580
    %1592 = vmatpush.bf16.msra.mxu0 %v573
    %1593 = vmatpush.bf16.msra.mxu0 %v566
    %1594 = vmatpush.bf16.msra.mxu0 %v559
    %1595 = vmatpush.bf16.msra.mxu0 %v552
    %1596 = vmatmul.bf16.gmra.mxu0 %v106
    %v1597 = vpop.f32.mrf.mxu0
    %v1598 = vadd.f32 0.0, %v1597
    %v1599 = vpop.f32.mrf.mxu0
    %v1600 = vadd.f32 0.0, %v1599
    %1601 = vmatmul.bf16.gmra.mxu0 %v110
    %v1602 = vpop.f32.mrf.mxu0
    %v1603 = vadd.f32 0.0, %v1602
    %v1604 = vpop.f32.mrf.mxu0
    %v1605 = vadd.f32 0.0, %v1604
    %1606 = vmatmul.bf16.gmra.mxu0 %v114
    %v1607 = vpop.f32.mrf.mxu0
    %v1608 = vadd.f32 0.0, %v1607
    %v1609 = vpop.f32.mrf.mxu0
    %v1610 = vadd.f32 0.0, %v1609
    %1611 = vmatmul.bf16.gmra.mxu0 %v118
    %v1612 = vpop.f32.mrf.mxu0
    %v1613 = vadd.f32 0.0, %v1612
    %v1614 = vpop.f32.mrf.mxu0
    %v1615 = vadd.f32 0.0, %v1614
    %1616 = vmatmul.bf16.gmra.mxu0 %v122
    %v1617 = vpop.f32.mrf.mxu0
    %v1618 = vadd.f32 0.0, %v1617
    %v1619 = vpop.f32.mrf.mxu0
    %v1620 = vadd.f32 0.0, %v1619
    %1621 = vdwg.mxu0
    %1622 = vmatpush.bf16.msra.mxu0 %v657
    %1623 = vmatpush.bf16.msra.mxu0 %v650
    %1624 = vmatpush.bf16.msra.mxu0 %v643
    %1625 = vmatpush.bf16.msra.mxu0 %v636
    %1626 = vmatpush.bf16.msra.mxu0 %v629
    %1627 = vmatpush.bf16.msra.mxu0 %v622
    %1628 = vmatpush.bf16.msra.mxu0 %v615
    %1629 = vmatpush.bf16.msra.mxu0 %v608
    %1630 = vmatmul.bf16.gmra.mxu0 %v107
    %v1631 = vpop.f32.mrf.mxu0
    %v1632 = vadd.f32 %v1598, %v1631
    %v1633 = vpop.f32.mrf.mxu0
    %v1634 = vadd.f32 %v1600, %v1633
    %1635 = vmatmul.bf16.gmra.mxu0 %v111
    %v1636 = vpop.f32.mrf.mxu0
    %v1637 = vadd.f32 %v1603, %v1636
    %v1638 = vpop.f32.mrf.mxu0
    %v1639 = vadd.f32 %v1605, %v1638
    %1640 = vmatmul.bf16.gmra.mxu0 %v115
    %v1641 = vpop.f32.mrf.mxu0
    %v1642 = vadd.f32 %v1608, %v1641
    %v1643 = vpop.f32.mrf.mxu0
    %v1644 = vadd.f32 %v1610, %v1643
    %1645 = vmatmul.bf16.gmra.mxu0 %v119
    %v1646 = vpop.f32.mrf.mxu0
    %v1647 = vadd.f32 %v1613, %v1646
    %v1648 = vpop.f32.mrf.mxu0
    %v1649 = vadd.f32 %v1615, %v1648
    %1650 = vmatmul.bf16.gmra.mxu0 %v123
    %v1651 = vpop.f32.mrf.mxu0
    %v1652 = vadd.f32 %v1618, %v1651
    %v1653 = vpop.f32.mrf.mxu0
    %v1654 = vadd.f32 %v1620, %v1653
    %1655 = vdwg.mxu0
    %1656 = vmatpush.bf16.msra.mxu0 %v713
    %1657 = vmatpush.bf16.msra.mxu0 %v706
    %1658 = vmatpush.bf16.msra.mxu0 %v699
    %1659 = vmatpush.bf16.msra.mxu0 %v692
    %1660 = vmatpush.bf16.msra.mxu0 %v685
    %1661 = vmatpush.bf16.msra.mxu0 %v678
    %1662 = vmatpush.bf16.msra.mxu0 %v671
    %1663 = vmatpush.bf16.msra.mxu0 %v664
    %1664 = vmatmul.bf16.gmra.mxu0 %v108
    %v1665 = vpop.f32.mrf.mxu0
    %v1666 = vadd.f32 %v1632, %v1665
    %v1667 = vpop.f32.mrf.mxu0
    %v1668 = vadd.f32 %v1634, %v1667
    %1669 = vmatmul.bf16.gmra.mxu0 %v112
    %v1670 = vpop.f32.mrf.mxu0
    %v1671 = vadd.f32 %v1637, %v1670
    %v1672 = vpop.f32.mrf.mxu0
    %v1673 = vadd.f32 %v1639, %v1672
    %1674 = vmatmul.bf16.gmra.mxu0 %v116
    %v1675 = vpop.f32.mrf.mxu0
    %v1676 = vadd.f32 %v1642, %v1675
    %v1677 = vpop.f32.mrf.mxu0
    %v1678 = vadd.f32 %v1644, %v1677
    %1679 = vmatmul.bf16.gmra.mxu0 %v120
    %v1680 = vpop.f32.mrf.mxu0
    %v1681 = vadd.f32 %v1647, %v1680
    %v1682 = vpop.f32.mrf.mxu0
    %v1683 = vadd.f32 %v1649, %v1682
    %1684 = vmatmul.bf16.gmra.mxu0 %v124
    %v1685 = vpop.f32.mrf.mxu0
    %v1686 = vadd.f32 %v1652, %v1685
    %v1687 = vpop.f32.mrf.mxu0
    %v1688 = vadd.f32 %v1654, %v1687
    %1689 = vdwg.mxu0
    %1690 = vmatpush.bf16.msra.mxu0 0
    %1691 = vmatpush.bf16.msra.mxu0 0
    %1692 = vmatpush.bf16.msra.mxu0 %v755
    %1693 = vmatpush.bf16.msra.mxu0 %v748
    %1694 = vmatpush.bf16.msra.mxu0 %v741
    %1695 = vmatpush.bf16.msra.mxu0 %v734
    %1696 = vmatpush.bf16.msra.mxu0 %v727
    %1697 = vmatpush.bf16.msra.mxu0 %v720
    %1698 = vmatmul.bf16.gmra.mxu0 %v758
    %v1699 = vpop.f32.mrf.mxu0
    %v1700 = vadd.f32 %v1666, %v1699
    %v1701 = vpop.f32.mrf.mxu0
    %v1702 = vadd.f32 %v1668, %v1701
    %1703 = vmatmul.bf16.gmra.mxu0 %v761
    %v1704 = vpop.f32.mrf.mxu0
    %v1705 = vadd.f32 %v1671, %v1704
    %v1706 = vpop.f32.mrf.mxu0
    %v1707 = vadd.f32 %v1673, %v1706
    %1708 = vmatmul.bf16.gmra.mxu0 %v764
    %v1709 = vpop.f32.mrf.mxu0
    %v1710 = vadd.f32 %v1676, %v1709
    %v1711 = vpop.f32.mrf.mxu0
    %v1712 = vadd.f32 %v1678, %v1711
    %1713 = vmatmul.bf16.gmra.mxu0 %v767
    %v1714 = vpop.f32.mrf.mxu0
    %v1715 = vadd.f32 %v1681, %v1714
    %v1716 = vpop.f32.mrf.mxu0
    %v1717 = vadd.f32 %v1683, %v1716
    %1718 = vmatmul.bf16.gmra.mxu0 %v770
    %v1719 = vpop.f32.mrf.mxu0
    %v1720 = vadd.f32 %v1686, %v1719
    %v1721 = vpop.f32.mrf.mxu0
    %v1722 = vadd.f32 %v1688, %v1721
    %1723 = vdwg.mxu0
    %1724 = vst [vmem:[#allocation2] sm:$0xff] %v884
    %1725 = vst [vmem:[#allocation2 + $0x8] sm:$0xff] %v1020
    %1726 = vst [vmem:[#allocation2 + $0x10] sm:$0xff] %v1156
    %1727 = vst [vmem:[#allocation2 + $0x18] sm:$0xff] %v1292
    %1728 = vst [vmem:[#allocation2 + $0x20] sm:$0xff] %v1428
    %1729 = vst [vmem:[#allocation2 + $0x28] sm:$0xff] %v1564
    %vm1730 = vcmask 130048
    %1731 = vst.msk [vmem:[#allocation2 + $0x30] sm:$0xff] %vm1730, %v1700
    %1732 = vst [vmem:[#allocation2 + $0x38] sm:$0xff] %v886
    %1733 = vst [vmem:[#allocation2 + $0x40] sm:$0xff] %v1022
    %1734 = vst [vmem:[#allocation2 + $0x48] sm:$0xff] %v1158
    %1735 = vst [vmem:[#allocation2 + $0x50] sm:$0xff] %v1294
    %1736 = vst [vmem:[#allocation2 + $0x58] sm:$0xff] %v1430
    %1737 = vst [vmem:[#allocation2 + $0x60] sm:$0xff] %v1566
    %1738 = vst.msk [vmem:[#allocation2 + $0x68] sm:$0xff] %vm1730, %v1702
    %1739 = vst [vmem:[#allocation2 + $0x70] sm:$0xff] %v889
    %1740 = vst [vmem:[#allocation2 + $0x78] sm:$0xff] %v1025
    %1741 = vst [vmem:[#allocation2 + $0x80] sm:$0xff] %v1161
    %1742 = vst [vmem:[#allocation2 + $0x88] sm:$0xff] %v1297
    %1743 = vst [vmem:[#allocation2 + $0x90] sm:$0xff] %v1433
    %1744 = vst [vmem:[#allocation2 + $0x98] sm:$0xff] %v1569
    %1745 = vst.msk [vmem:[#allocation2 + $0xa0] sm:$0xff] %vm1730, %v1705
    %1746 = vst [vmem:[#allocation2 + $0xa8] sm:$0xff] %v891
    %1747 = vst [vmem:[#allocation2 + $0xb0] sm:$0xff] %v1027
    %1748 = vst [vmem:[#allocation2 + $0xb8] sm:$0xff] %v1163
    %1749 = vst [vmem:[#allocation2 + $0xc0] sm:$0xff] %v1299
    %1750 = vst [vmem:[#allocation2 + $0xc8] sm:$0xff] %v1435
    %1751 = vst [vmem:[#allocation2 + $0xd0] sm:$0xff] %v1571
    %1752 = vst.msk [vmem:[#allocation2 + $0xd8] sm:$0xff] %vm1730, %v1707
    %1753 = vst [vmem:[#allocation2 + $0xe0] sm:$0xff] %v894
    %1754 = vst [vmem:[#allocation2 + $0xe8] sm:$0xff] %v1030
    %1755 = vst [vmem:[#allocation2 + $0xf0] sm:$0xff] %v1166
    %1756 = vst [vmem:[#allocation2 + $0xf8] sm:$0xff] %v1302
    %1757 = vst [vmem:[#allocation2 + $0x100] sm:$0xff] %v1438
    %1758 = vst [vmem:[#allocation2 + $0x108] sm:$0xff] %v1574
    %1759 = vst.msk [vmem:[#allocation2 + $0x110] sm:$0xff] %vm1730, %v1710
    %1760 = vst [vmem:[#allocation2 + $0x118] sm:$0xff] %v896
    %1761 = vst [vmem:[#allocation2 + $0x120] sm:$0xff] %v1032
    %1762 = vst [vmem:[#allocation2 + $0x128] sm:$0xff] %v1168
    %1763 = vst [vmem:[#allocation2 + $0x130] sm:$0xff] %v1304
    %1764 = vst [vmem:[#allocation2 + $0x138] sm:$0xff] %v1440
    %1765 = vst [vmem:[#allocation2 + $0x140] sm:$0xff] %v1576
    %1766 = vst.msk [vmem:[#allocation2 + $0x148] sm:$0xff] %vm1730, %v1712
    %1767 = vst [vmem:[#allocation2 + $0x150] sm:$0xff] %v899
    %1768 = vst [vmem:[#allocation2 + $0x158] sm:$0xff] %v1035
    %1769 = vst [vmem:[#allocation2 + $0x160] sm:$0xff] %v1171
    %1770 = vst [vmem:[#allocation2 + $0x168] sm:$0xff] %v1307
    %1771 = vst [vmem:[#allocation2 + $0x170] sm:$0xff] %v1443
    %1772 = vst [vmem:[#allocation2 + $0x178] sm:$0xff] %v1579
    %1773 = vst.msk [vmem:[#allocation2 + $0x180] sm:$0xff] %vm1730, %v1715
    %1774 = vst [vmem:[#allocation2 + $0x188] sm:$0xff] %v901
    %1775 = vst [vmem:[#allocation2 + $0x190] sm:$0xff] %v1037
    %1776 = vst [vmem:[#allocation2 + $0x198] sm:$0xff] %v1173
    %1777 = vst [vmem:[#allocation2 + $0x1a0] sm:$0xff] %v1309
    %1778 = vst [vmem:[#allocation2 + $0x1a8] sm:$0xff] %v1445
    %1779 = vst [vmem:[#allocation2 + $0x1b0] sm:$0xff] %v1581
    %1780 = vst.msk [vmem:[#allocation2 + $0x1b8] sm:$0xff] %vm1730, %v1717
    %1781 = vst [vmem:[#allocation2 + $0x1c0] sm:$0xff] %v904
    %1782 = vst [vmem:[#allocation2 + $0x1c8] sm:$0xff] %v1040
    %1783 = vst [vmem:[#allocation2 + $0x1d0] sm:$0xff] %v1176
    %1784 = vst [vmem:[#allocation2 + $0x1d8] sm:$0xff] %v1312
    %1785 = vst [vmem:[#allocation2 + $0x1e0] sm:$0xff] %v1448
    %1786 = vst [vmem:[#allocation2 + $0x1e8] sm:$0xff] %v1584
    %1787 = vst.msk [vmem:[#allocation2 + $0x1f0] sm:$0xff] %vm1730, %v1720
    %1788 = vst [vmem:[#allocation2 + $0x1f8] sm:$0xff] %v906
    %1789 = vst [vmem:[#allocation2 + $0x200] sm:$0xff] %v1042
    %1790 = vst [vmem:[#allocation2 + $0x208] sm:$0xff] %v1178
    %1791 = vst [vmem:[#allocation2 + $0x210] sm:$0xff] %v1314
    %1792 = vst [vmem:[#allocation2 + $0x218] sm:$0xff] %v1450
    %1793 = vst [vmem:[#allocation2 + $0x220] sm:$0xff] %v1586
    %1794 = vst.msk [vmem:[#allocation2 + $0x228] sm:$0xff] %vm1730, %v1722
    // Predicated region
    $region14: #{tpu_custom_call.1} parent=1 // pred_check
      _
    $region15: #{tpu_custom_call.1} parent=1 // pred_check_branch
      %1796 = sbr.rel (0) target = $region17
    $region16: #{tpu_custom_call.1} parent=1 // pred_region
      %1798 = vsyncadd [#allocation3], 0
      %s1799 = sshll.u32 [#allocation2], 4
      %s1800 = int_to_ptr.vmem [resolvable:$true] %s1799
      %s1801 = sshll.u32 %s3, 4
      %s1802 = int_to_ptr.hbm [resolvable:$true] %s1801
      %1807 = dma.vmem_to_hbm [thread:$0]  %s1800, 8960, %s1802, [#allocation3], 896, 896, 56
    $region17: #{tpu_custom_call.1} parent=1 // pred_fallthru
      _
    // Predicated region
    $region18: #{tpu_custom_call.1} parent=1 // pred_check
      _
    $region19: #{tpu_custom_call.1} parent=1 // pred_check_branch
      %1809 = sbr.rel (0) target = $region21
    $region20: #{tpu_custom_call.1} parent=1 // pred_region
      %1811 = dma.done [#allocation3], 8960
    $region21: #{tpu_custom_call.1} parent=1 // pred_fallthru
      _
    %1812 = vsyncpa [#allocation3], 1

</llo_original>
